<compile_context>
chip_gen: v7x
topology: tpu7x:2x2x1
jax: 0.10.0
libtpu: 0.0.40
codegen_flags: <defaults>
</compile_context>

<pallas_src>
import functools
import jax
import jax.numpy as jnp
from jax.experimental import pallas as pl
from jax.experimental.pallas import tpu as pltpu

# ----------------------------- hyper-parameters ------------------------------
B = 2            # batch
C = 64           # n_embd
HEAD = 4         # n_head
N = C // HEAD    # head_size = 16
FFN = 128        # dim_ffn
D_MIX = 16       # TIME_MIX_EXTRA_DIM
D_DECAY = 32     # TIME_DECAY_EXTRA_DIM
LAYER_ID = 0     # this block's id (layer 0 applies ln0, like the original RWKV block)
LN_EPS = 1e-5
GN_EPS = 64e-5   # RWKV6 ln_x GroupNorm eps (head_size_divisor = 8)


def _layernorm(x, w, b, eps=LN_EPS):
    mu = jnp.mean(x, axis=-1, keepdims=True)
    xc = x - mu
    var = jnp.mean(xc * xc, axis=-1, keepdims=True)
    return xc * jax.lax.rsqrt(var + eps) * w + b


# --------------------------------- kernel ------------------------------------
def rwkv6_block_kernel(
    # inputs
    x_ref, state_ref,
    ln0_w_ref, ln0_b_ref, ln1_w_ref, ln1_b_ref, ln2_w_ref, ln2_b_ref,
    lnx_w_ref, lnx_b_ref,
    maa_x_ref, maa_wkvrg_ref, maa_w1_ref, maa_w2bd_ref,
    w_proj_ref, tdecay_ref, td_w2_ref, tfirst_ref, wo_ref,
    fmaa_k_ref, fmaa_r_ref, w_ffn1_ref, fwv_ref,
    msum_ref, selm_ref,
    # outputs
    out_ref, state_out_ref,
):
    f32 = jnp.float32
    bf16 = jnp.bfloat16

    x = x_ref[...]                                   # (B, C)
    st = state_ref[...]                              # (B, 2+N, C)  read everything first
    att_xprev = st[:, 0, :]                          # (B, C)
    ffn_xprev = st[:, 1, :]                          # (B, C)
    S = st[:, 2:, :]                                 # (B, N, C): S[b, i, h*N+j]

    msum = msum_ref[...]                             # (C, C) head-block sum+replicate

    if LAYER_ID == 0:                                # static
        x = _layernorm(x, ln0_w_ref[...], ln0_b_ref[...])

    # --------------------------- time mixing ---------------------------------
    xln = _layernorm(x, ln1_w_ref[...], ln1_b_ref[...])
    sx = att_xprev - xln

    xxx = xln + sx * maa_x_ref[...]
    mix = jnp.tanh(jnp.dot(xxx.astype(bf16), maa_w1_ref[...],
                           preferred_element_type=f32))                # (B, 5*D_MIX)
    delta = jnp.dot(mix.astype(bf16), maa_w2bd_ref[...],
                    preferred_element_type=f32)                        # (B, 5*C)
    xln5 = jnp.concatenate([xln] * 5, axis=-1)
    sx5 = jnp.concatenate([sx] * 5, axis=-1)
    mixed = xln5 + sx5 * (maa_wkvrg_ref[...] + delta)                  # (B, 5*C) = [w|k|v|r|g]

    # fused projection: [r | k | v | g | td_hidden]   (B, 4*C + D_DECAY)
    proj = jnp.dot(mixed.astype(bf16), w_proj_ref[...], preferred_element_type=f32)
    r = proj[:, 0 * C:1 * C]
    k = proj[:, 1 * C:2 * C]
    v = proj[:, 2 * C:3 * C]
    gpre = proj[:, 3 * C:4 * C]
    g = gpre * jax.nn.sigmoid(gpre)                                    # SiLU gate
    tdh = jnp.tanh(proj[:, 4 * C:4 * C + D_DECAY])                     # (B, D_DECAY)
    ww = tdecay_ref[...] + jnp.dot(tdh.astype(bf16), td_w2_ref[...],
                                   preferred_element_type=f32)
    w = jnp.exp(-jnp.exp(ww))                                          # (B, C)

    # Spread r, k, w so the head-local index i sits on the sublane axis, replicated
    # across each head's 16-lane block:  spread[m, i, h*N+j] = a[m, h*N+i].
    rkw = jnp.concatenate([r, k, w], axis=0)                           # (3B, C)
    sel = rkw[:, None, :] * selm_ref[...][None, :, :]                  # (3B, N, C)
    spread = jnp.dot(sel.reshape(3 * B * N, C), msum,
                     preferred_element_type=f32).reshape(3 * B, N, C)
    R_t = spread[0:B]
    K_t = spread[B:2 * B]
    W_t = spread[2 * B:3 * B]

    kv = K_t * v[:, None, :]                                           # k_i * v_j
    S_new = kv + W_t * S                                               # (B, N, C)
    state_out_ref[:, pl.ds(2, N), :] = S_new

    ruk = jnp.dot(r * tfirst_ref[...] * k, msum,
                  preferred_element_type=f32)                          # per-head sum, replicated
    rS = jnp.sum(R_t * S, axis=1)                                      # (B, C)
    oh = ruk * v + rS                                                  # wkv output, (B, C)

    # ln_x == GroupNorm(HEAD groups) == per-head layernorm with affine, eps=64e-5
    inv_n = 1.0 / N
    mu = jnp.dot(oh, msum, preferred_element_type=f32) * inv_n
    oc = oh - mu
    var = jnp.dot(oc * oc, msum, preferred_element_type=f32) * inv_n
    gn = oc * jax.lax.rsqrt(var + GN_EPS) * lnx_w_ref[...] + lnx_b_ref[...]

    att = jnp.dot((gn * g).astype(bf16), wo_ref[...], preferred_element_type=f32)
    x = x + att                                                        # residual

    # -------------------------- channel mixing --------------------------------
    xln2 = _layernorm(x, ln2_w_ref[...], ln2_b_ref[...])
    sx2 = ffn_xprev - xln2
    xk2 = xln2 + sx2 * fmaa_k_ref[...]
    xr2 = xln2 + sx2 * fmaa_r_ref[...]
    kr = jnp.dot(jnp.concatenate([xk2, xr2], axis=-1).astype(bf16),
                 w_ffn1_ref[...], preferred_element_type=f32)          # (B, FFN + C)
    kk = jnp.square(jnp.maximum(kr[:, :FFN], 0.0))
    rr = jax.nn.sigmoid(kr[:, FFN:])
    ffn = rr * jnp.dot(kk.astype(bf16), fwv_ref[...], preferred_element_type=f32)
    out_ref[...] = x + ffn

    # token-shift rows of the packed state (inputs were all read at the top)
    state_out_ref[:, pl.ds(0, 1), :] = xln[:, None, :]
    state_out_ref[:, pl.ds(1, 1), :] = xln2[:, None, :]


# ------------------------------ fused params ----------------------------------
def prepare_fused_params(p):
    """One-time host-side fusion of weights into block-structured matrices."""
    f32, bf16 = jnp.float32, jnp.bfloat16

    # block-diagonal maa_w2: (5*D_MIX, 5*C)
    maa_w2_bd = jnp.zeros((5 * D_MIX, 5 * C), f32)
    for i in range(5):
        maa_w2_bd = maa_w2_bd.at[i * D_MIX:(i + 1) * D_MIX,
                                 i * C:(i + 1) * C].set(p["maa_w2"][i])

    # fused projection: mixed [w|k|v|r|g] (5C) -> [r|k|v|g|td_hidden] (4C + D_DECAY)
    w_proj = jnp.zeros((5 * C, 4 * C + D_DECAY), f32)
    w_proj = w_proj.at[3 * C:4 * C, 0 * C:1 * C].set(p["wr"])
    w_proj = w_proj.at[1 * C:2 * C, 1 * C:2 * C].set(p["wk"])
    w_proj = w_proj.at[2 * C:3 * C, 2 * C:3 * C].set(p["wv"])
    w_proj = w_proj.at[4 * C:5 * C, 3 * C:4 * C].set(p["wg"])
    w_proj = w_proj.at[0 * C:1 * C, 4 * C:4 * C + D_DECAY].set(p["td_w1"])

    # fused FFN first stage: [xk2 | xr2] (2C) -> [k (FFN) | r (C)]
    w_ffn1 = jnp.zeros((2 * C, FFN + C), f32)
    w_ffn1 = w_ffn1.at[0:C, 0:FFN].set(p["fwk"])
    w_ffn1 = w_ffn1.at[C:2 * C, FFN:FFN + C].set(p["fwr"])

    # head-block sum-and-replicate matrix / head-local-index selector
    lane = jnp.arange(C)
    msum = (lane[:, None] // N == lane[None, :] // N).astype(f32)       # (C, C)
    selm = (lane[None, :] % N == jnp.arange(N)[:, None]).astype(f32)    # (N, C)

    return (
        p["ln0_w"], p["ln0_b"], p["ln1_w"], p["ln1_b"], p["ln2_w"], p["ln2_b"],
        p["lnx_w"], p["lnx_b"],
        p["maa_x"], p["maa_wkvrg"].reshape(1, 5 * C),
        p["maa_w1"].astype(bf16), maa_w2_bd.astype(bf16),
        w_proj.astype(bf16), p["tdecay"], p["td_w2"].astype(bf16),
        p["tfirst"].reshape(1, C), p["wo"].astype(bf16),
        p["fmaa_k"], p["fmaa_r"], w_ffn1.astype(bf16), p["fwv"].astype(bf16),
        msum, selm,
    )


# --------------------------------- wrapper -----------------------------------
def block_forward(b_in, state, b_id, fused):
    # b_id selects the per-layer slice of a global state in the original export;
    # here `state` is already this block's slice, so b_id is accepted but unused.
    del b_id
    # TODO(synk): when running a full model, batch several layers/tokens per
    # pallas_call (stacked weights + grid over layers) to amortize launch overhead.
    inputs = (b_in, state) + tuple(fused)
    vmem = pl.BlockSpec(memory_space=pltpu.MemorySpace.VMEM)

    out, new_state = pl.pallas_call(
        rwkv6_block_kernel,
        out_shape=(
            jax.ShapeDtypeStruct((B, C), jnp.float32),
            jax.ShapeDtypeStruct((B, 2 + N, C), jnp.float32),
        ),
        in_specs=[vmem] * len(inputs),
        out_specs=(vmem, vmem),
    )(*inputs)
    return out, new_state


# ------------------------------ pure-JAX reference ---------------------------
def block_forward_ref(b_in, state, p):
    x = b_in
    att_xprev = state[:, 0, :]
    ffn_xprev = state[:, 1, :]
    S = state[:, 2:, :].reshape(B, N, HEAD, N).transpose(0, 2, 1, 3)   # (B,H,N,N)

    if LAYER_ID == 0:
        x = _layernorm(x, p["ln0_w"], p["ln0_b"])
    xln = _layernorm(x, p["ln1_w"], p["ln1_b"])
    sx = att_xprev - xln
    xxx = xln + sx * p["maa_x"]
    mix = jnp.tanh(xxx @ p["maa_w1"]).reshape(B, 5, D_MIX).transpose(1, 0, 2)
    m = jnp.einsum("sbd,sdc->sbc", mix, p["maa_w2"])
    xs = xln[None] + sx[None] * (p["maa_wkvrg"][:, None, :] + m)
    xw, xk, xv, xr, xg = xs
    r = (xr @ p["wr"]).reshape(B, HEAD, N)
    k = (xk @ p["wk"]).reshape(B, HEAD, N)
    v = (xv @ p["wv"]).reshape(B, HEAD, N)
    gp = xg @ p["wg"]
    g = gp * jax.nn.sigmoid(gp)
    ww = p["tdecay"] + jnp.tanh(xw @ p["td_w1"]) @ p["td_w2"]
    w = jnp.exp(-jnp.exp(ww)).reshape(B, HEAD, N)
    u = p["tfirst"][None]
    kv = k[..., :, None] * v[..., None, :]
    out = jnp.einsum("bhi,bhij->bhj", r, u[..., None] * kv + S)
    S_new = kv + w[..., None] * S
    mu = out.mean(-1, keepdims=True)
    var = ((out - mu) ** 2).mean(-1, keepdims=True)
    gn = ((out - mu) * jax.lax.rsqrt(var + GN_EPS)).reshape(B, C) * p["lnx_w"] + p["lnx_b"]
    x = x + (gn * g) @ p["wo"]

    xln2 = _layernorm(x, p["ln2_w"], p["ln2_b"])
    sx2 = ffn_xprev - xln2
    xk2 = xln2 + sx2 * p["fmaa_k"]
    xr2 = xln2 + sx2 * p["fmaa_r"]
    rr = jax.nn.sigmoid(xr2 @ p["fwr"])
    kk = jnp.square(jnp.maximum(xk2 @ p["fwk"], 0.0))
    b_out = x + rr * (kk @ p["fwv"])

    wkv_flat = S_new.transpose(0, 2, 1, 3).reshape(B, N, C)
    new_state = jnp.concatenate([xln[:, None, :], xln2[:, None, :], wkv_flat], axis=1)
    return b_out, new_state


# ------------------------------- param init ----------------------------------
def init_params(key):
    ks = jax.random.split(key, 20)
    nrm = lambda k, shape, s=0.02: (s * jax.random.normal(k, shape)).astype(jnp.float32)
    uni = lambda k, shape: jax.random.uniform(k, shape, dtype=jnp.float32)
    ones = jnp.ones((1, C), jnp.float32)
    zeros = jnp.zeros((1, C), jnp.float32)
    return {
        "ln0_w": ones, "ln0_b": zeros,
        "ln1_w": ones, "ln1_b": zeros,
        "ln2_w": ones, "ln2_b": zeros,
        "lnx_w": ones + nrm(ks[0], (1, C)), "lnx_b": nrm(ks[1], (1, C)),
        "maa_x": uni(ks[2], (1, C)),
        "maa_wkvrg": uni(ks[3], (5, C)),
        "maa_w1": nrm(ks[4], (C, 5 * D_MIX)),
        "maa_w2": nrm(ks[5], (5, D_MIX, C)),
        "tdecay": nrm(ks[6], (1, C), 0.5) - 0.5,
        "td_w1": nrm(ks[7], (C, D_DECAY)),
        "td_w2": nrm(ks[8], (D_DECAY, C)),
        "tfirst": nrm(ks[9], (HEAD, N), 0.5),
        "wr": nrm(ks[10], (C, C)), "wk": nrm(ks[11], (C, C)), "wv": nrm(ks[12], (C, C)),
        "wg": nrm(ks[13], (C, C)), "wo": nrm(ks[14], (C, C)),
        "fmaa_k": uni(ks[15], (1, C)), "fmaa_r": uni(ks[16], (1, C)),
        "fwk": nrm(ks[17], (C, FFN)), "fwv": nrm(ks[18], (FFN, C)), "fwr": nrm(ks[19], (C, C)),
    }


# ----------------------------------- main -------------------------------------
if __name__ == "__main__":
    key = jax.random.PRNGKey(0)
    k_p, k_x, k_s1, k_s2, k_s3 = jax.random.split(key, 5)
    params = init_params(k_p)
    fused = prepare_fused_params(params)   # one-time weight fusion / bf16 cast

    b_in = jax.random.normal(k_x, (B, C), dtype=jnp.float32)
    att_xp0 = 0.1 * jax.random.normal(k_s1, (B, 1, C), dtype=jnp.float32)
    ffn_xp0 = 0.1 * jax.random.normal(k_s2, (B, 1, C), dtype=jnp.float32)
    wkv0 = 0.01 * jax.random.normal(k_s3, (B, N, C), dtype=jnp.float32)
    state = jnp.concatenate([att_xp0, ffn_xp0, wkv0], axis=1)           # (B, 2+N, C)
    b_id = jnp.int32(LAYER_ID)

    fwd = jax.jit(functools.partial(block_forward, fused=fused))
    b_out, new_state = fwd(b_in, state, b_id)
    jax.block_until_ready((b_out, new_state))

    b_out_ref, new_state_ref = block_forward_ref(b_in, state, params)
    err_out = float(jnp.max(jnp.abs(b_out - b_out_ref)))
    err_state = float(jnp.max(jnp.abs(new_state - new_state_ref)))
    assert b_out.shape == (B, C) and new_state.shape == (B, 2 + N, C)
    assert jnp.all(jnp.isfinite(b_out)) and jnp.all(jnp.isfinite(new_state))
    assert err_out < 5e-2 and err_state < 5e-2, (err_out, err_state)
    print("KERNEL_OK")
</pallas_src>

<mosaic_0001>
module attributes {stable_mosaic.version = 11 : i64} {
  func.func @rwkv6_block_kernel(%arg0: memref<2x64xf32, #tpu.memory_space<vmem>>, %arg1: memref<2x18x64xf32, #tpu.memory_space<vmem>>, %arg2: memref<1x64xf32, #tpu.memory_space<vmem>>, %arg3: memref<1x64xf32, #tpu.memory_space<vmem>>, %arg4: memref<1x64xf32, #tpu.memory_space<vmem>>, %arg5: memref<1x64xf32, #tpu.memory_space<vmem>>, %arg6: memref<1x64xf32, #tpu.memory_space<vmem>>, %arg7: memref<1x64xf32, #tpu.memory_space<vmem>>, %arg8: memref<1x64xf32, #tpu.memory_space<vmem>>, %arg9: memref<1x64xf32, #tpu.memory_space<vmem>>, %arg10: memref<1x64xf32, #tpu.memory_space<vmem>>, %arg11: memref<1x320xf32, #tpu.memory_space<vmem>>, %arg12: memref<64x80xbf16, #tpu.memory_space<vmem>>, %arg13: memref<80x320xbf16, #tpu.memory_space<vmem>>, %arg14: memref<320x288xbf16, #tpu.memory_space<vmem>>, %arg15: memref<1x64xf32, #tpu.memory_space<vmem>>, %arg16: memref<32x64xbf16, #tpu.memory_space<vmem>>, %arg17: memref<1x64xf32, #tpu.memory_space<vmem>>, %arg18: memref<64x64xbf16, #tpu.memory_space<vmem>>, %arg19: memref<1x64xf32, #tpu.memory_space<vmem>>, %arg20: memref<1x64xf32, #tpu.memory_space<vmem>>, %arg21: memref<128x192xbf16, #tpu.memory_space<vmem>>, %arg22: memref<128x64xbf16, #tpu.memory_space<vmem>>, %arg23: memref<64x64xf32, #tpu.memory_space<vmem>>, %arg24: memref<16x64xf32, #tpu.memory_space<vmem>>, %arg25: memref<2x64xf32, #tpu.memory_space<vmem>>, %arg26: memref<2x18x64xf32, #tpu.memory_space<vmem>>) attributes {dimension_semantics = [], scalar_prefetch = 0 : i64, scratch_operands = 0 : i64, tpu.core_type = #tpu.core_type<tc>} {
    %c0 = arith.constant 0 : index
    %c0_0 = arith.constant 0 : index
    %0 = vector.load %arg0[%c0, %c0_0] : memref<2x64xf32, #tpu.memory_space<vmem>>, vector<2x64xf32>
    %c0_1 = arith.constant 0 : index
    %c0_2 = arith.constant 0 : index
    %c0_3 = arith.constant 0 : index
    %1 = vector.load %arg1[%c0_1, %c0_2, %c0_3] : memref<2x18x64xf32, #tpu.memory_space<vmem>>, vector<2x18x64xf32>
    %2 = vector.extract_strided_slice %1 {offsets = [0, 0, 0], sizes = [2, 1, 64], strides = [1, 1, 1]} : vector<2x18x64xf32> to vector<2x1x64xf32>
    %3 = vector.shape_cast %2 : vector<2x1x64xf32> to vector<2x64xf32>
    %4 = vector.extract_strided_slice %1 {offsets = [0, 1, 0], sizes = [2, 1, 64], strides = [1, 1, 1]} : vector<2x18x64xf32> to vector<2x1x64xf32>
    %5 = vector.shape_cast %4 : vector<2x1x64xf32> to vector<2x64xf32>
    %6 = vector.extract_strided_slice %1 {offsets = [0, 2, 0], sizes = [2, 16, 64], strides = [1, 1, 1]} : vector<2x18x64xf32> to vector<2x16x64xf32>
    %c0_4 = arith.constant 0 : index
    %c0_5 = arith.constant 0 : index
    %7 = vector.load %arg23[%c0_4, %c0_5] : memref<64x64xf32, #tpu.memory_space<vmem>>, vector<64x64xf32>
    %c0_6 = arith.constant 0 : index
    %c0_7 = arith.constant 0 : index
    %8 = vector.load %arg2[%c0_6, %c0_7] : memref<1x64xf32, #tpu.memory_space<vmem>>, vector<1x64xf32>
    %c0_8 = arith.constant 0 : index
    %c0_9 = arith.constant 0 : index
    %9 = vector.load %arg3[%c0_8, %c0_9] : memref<1x64xf32, #tpu.memory_space<vmem>>, vector<1x64xf32>
    %cst = arith.constant dense<0.000000e+00> : vector<2xf32>
    %10 = vector.multi_reduction <add>, %0, %cst [1] : vector<2x64xf32> to vector<2xf32>
    %11 = vector.shape_cast %10 : vector<2xf32> to vector<2x1xf32>
    %cst_10 = arith.constant 6.400000e+01 : f32
    %12 = vector.broadcast %cst_10 : f32 to vector<2x1xf32>
    %13 = arith.divf %11, %12 : vector<2x1xf32>
    %14 = vector.broadcast %13 : vector<2x1xf32> to vector<2x64xf32>
    %15 = arith.subf %0, %14 : vector<2x64xf32>
    %16 = arith.mulf %15, %15 : vector<2x64xf32>
    %cst_11 = arith.constant dense<0.000000e+00> : vector<2xf32>
    %17 = vector.multi_reduction <add>, %16, %cst_11 [1] : vector<2x64xf32> to vector<2xf32>
    %18 = vector.shape_cast %17 : vector<2xf32> to vector<2x1xf32>
    %cst_12 = arith.constant 6.400000e+01 : f32
    %19 = vector.broadcast %cst_12 : f32 to vector<2x1xf32>
    %20 = arith.divf %18, %19 : vector<2x1xf32>
    %cst_13 = arith.constant 9.99999974E-6 : f32
    %21 = vector.broadcast %cst_13 : f32 to vector<2x1xf32>
    %22 = arith.addf %20, %21 : vector<2x1xf32>
    %23 = math.rsqrt %22 : vector<2x1xf32>
    %24 = vector.broadcast %23 : vector<2x1xf32> to vector<2x64xf32>
    %25 = arith.mulf %15, %24 : vector<2x64xf32>
    %26 = vector.broadcast %8 : vector<1x64xf32> to vector<2x64xf32>
    %27 = arith.mulf %25, %26 : vector<2x64xf32>
    %28 = vector.broadcast %9 : vector<1x64xf32> to vector<2x64xf32>
    %29 = arith.addf %27, %28 : vector<2x64xf32>
    %c0_14 = arith.constant 0 : index
    %c0_15 = arith.constant 0 : index
    %30 = vector.load %arg4[%c0_14, %c0_15] : memref<1x64xf32, #tpu.memory_space<vmem>>, vector<1x64xf32>
    %c0_16 = arith.constant 0 : index
    %c0_17 = arith.constant 0 : index
    %31 = vector.load %arg5[%c0_16, %c0_17] : memref<1x64xf32, #tpu.memory_space<vmem>>, vector<1x64xf32>
    %cst_18 = arith.constant dense<0.000000e+00> : vector<2xf32>
    %32 = vector.multi_reduction <add>, %29, %cst_18 [1] : vector<2x64xf32> to vector<2xf32>
    %33 = vector.shape_cast %32 : vector<2xf32> to vector<2x1xf32>
    %cst_19 = arith.constant 6.400000e+01 : f32
    %34 = vector.broadcast %cst_19 : f32 to vector<2x1xf32>
    %35 = arith.divf %33, %34 : vector<2x1xf32>
    %36 = vector.broadcast %35 : vector<2x1xf32> to vector<2x64xf32>
    %37 = arith.subf %29, %36 : vector<2x64xf32>
    %38 = arith.mulf %37, %37 : vector<2x64xf32>
    %cst_20 = arith.constant dense<0.000000e+00> : vector<2xf32>
    %39 = vector.multi_reduction <add>, %38, %cst_20 [1] : vector<2x64xf32> to vector<2xf32>
    %40 = vector.shape_cast %39 : vector<2xf32> to vector<2x1xf32>
    %cst_21 = arith.constant 6.400000e+01 : f32
    %41 = vector.broadcast %cst_21 : f32 to vector<2x1xf32>
    %42 = arith.divf %40, %41 : vector<2x1xf32>
    %cst_22 = arith.constant 9.99999974E-6 : f32
    %43 = vector.broadcast %cst_22 : f32 to vector<2x1xf32>
    %44 = arith.addf %42, %43 : vector<2x1xf32>
    %45 = math.rsqrt %44 : vector<2x1xf32>
    %46 = vector.broadcast %45 : vector<2x1xf32> to vector<2x64xf32>
    %47 = arith.mulf %37, %46 : vector<2x64xf32>
    %48 = vector.broadcast %30 : vector<1x64xf32> to vector<2x64xf32>
    %49 = arith.mulf %47, %48 : vector<2x64xf32>
    %50 = vector.broadcast %31 : vector<1x64xf32> to vector<2x64xf32>
    %51 = arith.addf %49, %50 : vector<2x64xf32>
    %52 = arith.subf %3, %51 : vector<2x64xf32>
    %c0_23 = arith.constant 0 : index
    %c0_24 = arith.constant 0 : index
    %53 = vector.load %arg10[%c0_23, %c0_24] : memref<1x64xf32, #tpu.memory_space<vmem>>, vector<1x64xf32>
    %54 = vector.broadcast %53 : vector<1x64xf32> to vector<2x64xf32>
    %55 = arith.mulf %52, %54 : vector<2x64xf32>
    %56 = arith.addf %51, %55 : vector<2x64xf32>
    %57 = arith.truncf %56 : vector<2x64xf32> to vector<2x64xbf16>
    %c0_25 = arith.constant 0 : index
    %c0_26 = arith.constant 0 : index
    %58 = vector.load %arg12[%c0_25, %c0_26] : memref<64x80xbf16, #tpu.memory_space<vmem>>, vector<64x80xbf16>
    %cst_27 = arith.constant dense<0.000000e+00> : vector<2x80xf32>
    %59 = tpu.matmul %57, %58, %cst_27 {dimension_numbers = #tpu.dot_dimension_numbers<[1], [0], [0], [1], [0, 0, 1, 1], [], []>} : vector<2x64xbf16>, vector<64x80xbf16>, vector<2x80xf32> -> vector<2x80xf32>
    %60 = math.tanh %59 : vector<2x80xf32>
    %61 = arith.truncf %60 : vector<2x80xf32> to vector<2x80xbf16>
    %c0_28 = arith.constant 0 : index
    %c0_29 = arith.constant 0 : index
    %62 = vector.load %arg13[%c0_28, %c0_29] : memref<80x320xbf16, #tpu.memory_space<vmem>>, vector<80x320xbf16>
    %cst_30 = arith.constant dense<0.000000e+00> : vector<2x320xf32>
    %63 = tpu.matmul %61, %62, %cst_30 {dimension_numbers = #tpu.dot_dimension_numbers<[1], [0], [0], [1], [0, 0, 1, 1], [], []>} : vector<2x80xbf16>, vector<80x320xbf16>, vector<2x320xf32> -> vector<2x320xf32>
    %64 = tpu.concatenate %51, %51, %51, %51, %51 in 1 : vector<2x64xf32>, vector<2x64xf32>, vector<2x64xf32>, vector<2x64xf32>, vector<2x64xf32> -> vector<2x320xf32>
    %65 = tpu.concatenate %52, %52, %52, %52, %52 in 1 : vector<2x64xf32>, vector<2x64xf32>, vector<2x64xf32>, vector<2x64xf32>, vector<2x64xf32> -> vector<2x320xf32>
    %c0_31 = arith.constant 0 : index
    %c0_32 = arith.constant 0 : index
    %66 = vector.load %arg11[%c0_31, %c0_32] : memref<1x320xf32, #tpu.memory_space<vmem>>, vector<1x320xf32>
    %67 = vector.broadcast %66 : vector<1x320xf32> to vector<2x320xf32>
    %68 = arith.addf %67, %63 : vector<2x320xf32>
    %69 = arith.mulf %65, %68 : vector<2x320xf32>
    %70 = arith.addf %64, %69 : vector<2x320xf32>
    %71 = arith.truncf %70 : vector<2x320xf32> to vector<2x320xbf16>
    %c0_33 = arith.constant 0 : index
    %c0_34 = arith.constant 0 : index
    %72 = vector.load %arg14[%c0_33, %c0_34] : memref<320x288xbf16, #tpu.memory_space<vmem>>, vector<320x288xbf16>
    %cst_35 = arith.constant dense<0.000000e+00> : vector<2x288xf32>
    %73 = tpu.matmul %71, %72, %cst_35 {dimension_numbers = #tpu.dot_dimension_numbers<[1], [0], [0], [1], [0, 0, 1, 1], [], []>} : vector<2x320xbf16>, vector<320x288xbf16>, vector<2x288xf32> -> vector<2x288xf32>
    %74 = vector.extract_strided_slice %73 {offsets = [0, 0], sizes = [2, 64], strides = [1, 1]} : vector<2x288xf32> to vector<2x64xf32>
    %75 = vector.extract_strided_slice %73 {offsets = [0, 64], sizes = [2, 64], strides = [1, 1]} : vector<2x288xf32> to vector<2x64xf32>
    %76 = vector.extract_strided_slice %73 {offsets = [0, 128], sizes = [2, 64], strides = [1, 1]} : vector<2x288xf32> to vector<2x64xf32>
    %77 = vector.extract_strided_slice %73 {offsets = [0, 192], sizes = [2, 64], strides = [1, 1]} : vector<2x288xf32> to vector<2x64xf32>
    %78 = arith.negf %77 : vector<2x64xf32>
    %79 = math.exp %78 : vector<2x64xf32>
    %cst_36 = arith.constant 1.000000e+00 : f32
    %80 = vector.broadcast %cst_36 : f32 to vector<2x64xf32>
    %81 = arith.addf %80, %79 : vector<2x64xf32>
    %82 = arith.divf %80, %81 : vector<2x64xf32>
    %83 = arith.mulf %77, %82 : vector<2x64xf32>
    %84 = vector.extract_strided_slice %73 {offsets = [0, 256], sizes = [2, 32], strides = [1, 1]} : vector<2x288xf32> to vector<2x32xf32>
    %85 = math.tanh %84 : vector<2x32xf32>
    %c0_37 = arith.constant 0 : index
    %c0_38 = arith.constant 0 : index
    %86 = vector.load %arg15[%c0_37, %c0_38] : memref<1x64xf32, #tpu.memory_space<vmem>>, vector<1x64xf32>
    %87 = arith.truncf %85 : vector<2x32xf32> to vector<2x32xbf16>
    %c0_39 = arith.constant 0 : index
    %c0_40 = arith.constant 0 : index
    %88 = vector.load %arg16[%c0_39, %c0_40] : memref<32x64xbf16, #tpu.memory_space<vmem>>, vector<32x64xbf16>
    %cst_41 = arith.constant dense<0.000000e+00> : vector<2x64xf32>
    %89 = tpu.matmul %87, %88, %cst_41 {dimension_numbers = #tpu.dot_dimension_numbers<[1], [0], [0], [1], [0, 0, 1, 1], [], []>} : vector<2x32xbf16>, vector<32x64xbf16>, vector<2x64xf32> -> vector<2x64xf32>
    %90 = vector.broadcast %86 : vector<1x64xf32> to vector<2x64xf32>
    %91 = arith.addf %90, %89 : vector<2x64xf32>
    %92 = math.exp %91 : vector<2x64xf32>
    %cst_42 = arith.constant 0.000000e+00 : f32
    %93 = vector.broadcast %cst_42 : f32 to vector<2x64xf32>
    %94 = arith.subf %93, %92 : vector<2x64xf32>
    %95 = math.exp %94 : vector<2x64xf32>
    %96 = tpu.concatenate %74, %75, %95 in 0 : vector<2x64xf32>, vector<2x64xf32>, vector<2x64xf32> -> vector<6x64xf32>
    %97 = vector.shape_cast %96 : vector<6x64xf32> to vector<6x1x64xf32>
    %c0_43 = arith.constant 0 : index
    %c0_44 = arith.constant 0 : index
    %98 = vector.load %arg24[%c0_43, %c0_44] : memref<16x64xf32, #tpu.memory_space<vmem>>, vector<16x64xf32>
    %99 = vector.shape_cast %98 : vector<16x64xf32> to vector<1x16x64xf32>
    %100 = vector.broadcast %97 : vector<6x1x64xf32> to vector<6x16x64xf32>
    %101 = vector.broadcast %99 : vector<1x16x64xf32> to vector<6x16x64xf32>
    %102 = arith.mulf %100, %101 : vector<6x16x64xf32>
    %103 = vector.shape_cast %102 : vector<6x16x64xf32> to vector<96x64xf32>
    %cst_45 = arith.constant dense<0.000000e+00> : vector<96x64xf32>
    %104 = tpu.matmul %103, %7, %cst_45 {dimension_numbers = #tpu.dot_dimension_numbers<[1], [0], [0], [1], [0, 0, 1, 1], [], []>} : vector<96x64xf32>, vector<64x64xf32>, vector<96x64xf32> -> vector<96x64xf32>
    %105 = vector.shape_cast %104 : vector<96x64xf32> to vector<6x16x64xf32>
    %106 = vector.extract_strided_slice %105 {offsets = [0, 0, 0], sizes = [2, 16, 64], strides = [1, 1, 1]} : vector<6x16x64xf32> to vector<2x16x64xf32>
    %107 = vector.extract_strided_slice %105 {offsets = [2, 0, 0], sizes = [2, 16, 64], strides = [1, 1, 1]} : vector<6x16x64xf32> to vector<2x16x64xf32>
    %108 = vector.extract_strided_slice %105 {offsets = [4, 0, 0], sizes = [2, 16, 64], strides = [1, 1, 1]} : vector<6x16x64xf32> to vector<2x16x64xf32>
    %109 = vector.shape_cast %76 : vector<2x64xf32> to vector<2x1x64xf32>
    %110 = vector.broadcast %109 : vector<2x1x64xf32> to vector<2x16x64xf32>
    %111 = arith.mulf %107, %110 : vector<2x16x64xf32>
    %112 = arith.mulf %108, %6 : vector<2x16x64xf32>
    %113 = arith.addf %111, %112 : vector<2x16x64xf32>
    %c0_46 = arith.constant 0 : index
    %c2 = arith.constant 2 : index
    %c0_47 = arith.constant 0 : index
    %114 = vector.load %arg26[%c0_46, %c2, %c0_47] : memref<2x18x64xf32, #tpu.memory_space<vmem>>, vector<2x16x64xf32>
    tpu.vector_store %arg26[%c0_46, %c2, %c0_47], %113 {strides = array<i32>} : memref<2x18x64xf32, #tpu.memory_space<vmem>>, vector<2x16x64xf32>,
    %c0_48 = arith.constant 0 : index
    %c0_49 = arith.constant 0 : index
    %115 = vector.load %arg17[%c0_48, %c0_49] : memref<1x64xf32, #tpu.memory_space<vmem>>, vector<1x64xf32>
    %116 = vector.broadcast %115 : vector<1x64xf32> to vector<2x64xf32>
    %117 = arith.mulf %74, %116 : vector<2x64xf32>
    %118 = arith.mulf %117, %75 : vector<2x64xf32>
    %cst_50 = arith.constant dense<0.000000e+00> : vector<2x64xf32>
    %119 = tpu.matmul %118, %7, %cst_50 {dimension_numbers = #tpu.dot_dimension_numbers<[1], [0], [0], [1], [0, 0, 1, 1], [], []>} : vector<2x64xf32>, vector<64x64xf32>, vector<2x64xf32> -> vector<2x64xf32>
    %120 = arith.mulf %106, %6 : vector<2x16x64xf32>
    %cst_51 = arith.constant dense<0.000000e+00> : vector<2x64xf32>
    %121 = vector.multi_reduction <add>, %120, %cst_51 [1] : vector<2x16x64xf32> to vector<2x64xf32>
    %122 = arith.mulf %119, %76 : vector<2x64xf32>
    %123 = arith.addf %122, %121 : vector<2x64xf32>
    %cst_52 = arith.constant dense<0.000000e+00> : vector<2x64xf32>
    %124 = tpu.matmul %123, %7, %cst_52 {dimension_numbers = #tpu.dot_dimension_numbers<[1], [0], [0], [1], [0, 0, 1, 1], [], []>} : vector<2x64xf32>, vector<64x64xf32>, vector<2x64xf32> -> vector<2x64xf32>
    %cst_53 = arith.constant 6.250000e-02 : f32
    %125 = vector.broadcast %cst_53 : f32 to vector<2x64xf32>
    %126 = arith.mulf %124, %125 : vector<2x64xf32>
    %127 = arith.subf %123, %126 : vector<2x64xf32>
    %128 = arith.mulf %127, %127 : vector<2x64xf32>
    %cst_54 = arith.constant dense<0.000000e+00> : vector<2x64xf32>
    %129 = tpu.matmul %128, %7, %cst_54 {dimension_numbers = #tpu.dot_dimension_numbers<[1], [0], [0], [1], [0, 0, 1, 1], [], []>} : vector<2x64xf32>, vector<64x64xf32>, vector<2x64xf32> -> vector<2x64xf32>
    %cst_55 = arith.constant 6.250000e-02 : f32
    %130 = vector.broadcast %cst_55 : f32 to vector<2x64xf32>
    %131 = arith.mulf %129, %130 : vector<2x64xf32>
    %cst_56 = arith.constant 6.400000e-04 : f32
    %132 = vector.broadcast %cst_56 : f32 to vector<2x64xf32>
    %133 = arith.addf %131, %132 : vector<2x64xf32>
    %134 = math.rsqrt %133 : vector<2x64xf32>
    %135 = arith.mulf %127, %134 : vector<2x64xf32>
    %c0_57 = arith.constant 0 : index
    %c0_58 = arith.constant 0 : index
    %136 = vector.load %arg8[%c0_57, %c0_58] : memref<1x64xf32, #tpu.memory_space<vmem>>, vector<1x64xf32>
    %137 = vector.broadcast %136 : vector<1x64xf32> to vector<2x64xf32>
    %138 = arith.mulf %135, %137 : vector<2x64xf32>
    %c0_59 = arith.constant 0 : index
    %c0_60 = arith.constant 0 : index
    %139 = vector.load %arg9[%c0_59, %c0_60] : memref<1x64xf32, #tpu.memory_space<vmem>>, vector<1x64xf32>
    %140 = vector.broadcast %139 : vector<1x64xf32> to vector<2x64xf32>
    %141 = arith.addf %138, %140 : vector<2x64xf32>
    %142 = arith.mulf %141, %83 : vector<2x64xf32>
    %143 = arith.truncf %142 : vector<2x64xf32> to vector<2x64xbf16>
    %c0_61 = arith.constant 0 : index
    %c0_62 = arith.constant 0 : index
    %144 = vector.load %arg18[%c0_61, %c0_62] : memref<64x64xbf16, #tpu.memory_space<vmem>>, vector<64x64xbf16>
    %cst_63 = arith.constant dense<0.000000e+00> : vector<2x64xf32>
    %145 = tpu.matmul %143, %144, %cst_63 {dimension_numbers = #tpu.dot_dimension_numbers<[1], [0], [0], [1], [0, 0, 1, 1], [], []>} : vector<2x64xbf16>, vector<64x64xbf16>, vector<2x64xf32> -> vector<2x64xf32>
    %146 = arith.addf %29, %145 : vector<2x64xf32>
    %c0_64 = arith.constant 0 : index
    %c0_65 = arith.constant 0 : index
    %147 = vector.load %arg6[%c0_64, %c0_65] : memref<1x64xf32, #tpu.memory_space<vmem>>, vector<1x64xf32>
    %c0_66 = arith.constant 0 : index
    %c0_67 = arith.constant 0 : index
    %148 = vector.load %arg7[%c0_66, %c0_67] : memref<1x64xf32, #tpu.memory_space<vmem>>, vector<1x64xf32>
    %cst_68 = arith.constant dense<0.000000e+00> : vector<2xf32>
    %149 = vector.multi_reduction <add>, %146, %cst_68 [1] : vector<2x64xf32> to vector<2xf32>
    %150 = vector.shape_cast %149 : vector<2xf32> to vector<2x1xf32>
    %cst_69 = arith.constant 6.400000e+01 : f32
    %151 = vector.broadcast %cst_69 : f32 to vector<2x1xf32>
    %152 = arith.divf %150, %151 : vector<2x1xf32>
    %153 = vector.broadcast %152 : vector<2x1xf32> to vector<2x64xf32>
    %154 = arith.subf %146, %153 : vector<2x64xf32>
    %155 = arith.mulf %154, %154 : vector<2x64xf32>
    %cst_70 = arith.constant dense<0.000000e+00> : vector<2xf32>
    %156 = vector.multi_reduction <add>, %155, %cst_70 [1] : vector<2x64xf32> to vector<2xf32>
    %157 = vector.shape_cast %156 : vector<2xf32> to vector<2x1xf32>
    %cst_71 = arith.constant 6.400000e+01 : f32
    %158 = vector.broadcast %cst_71 : f32 to vector<2x1xf32>
    %159 = arith.divf %157, %158 : vector<2x1xf32>
    %cst_72 = arith.constant 9.99999974E-6 : f32
    %160 = vector.broadcast %cst_72 : f32 to vector<2x1xf32>
    %161 = arith.addf %159, %160 : vector<2x1xf32>
    %162 = math.rsqrt %161 : vector<2x1xf32>
    %163 = vector.broadcast %162 : vector<2x1xf32> to vector<2x64xf32>
    %164 = arith.mulf %154, %163 : vector<2x64xf32>
    %165 = vector.broadcast %147 : vector<1x64xf32> to vector<2x64xf32>
    %166 = arith.mulf %164, %165 : vector<2x64xf32>
    %167 = vector.broadcast %148 : vector<1x64xf32> to vector<2x64xf32>
    %168 = arith.addf %166, %167 : vector<2x64xf32>
    %169 = arith.subf %5, %168 : vector<2x64xf32>
    %c0_73 = arith.constant 0 : index
    %c0_74 = arith.constant 0 : index
    %170 = vector.load %arg19[%c0_73, %c0_74] : memref<1x64xf32, #tpu.memory_space<vmem>>, vector<1x64xf32>
    %171 = vector.broadcast %170 : vector<1x64xf32> to vector<2x64xf32>
    %172 = arith.mulf %169, %171 : vector<2x64xf32>
    %173 = arith.addf %168, %172 : vector<2x64xf32>
    %c0_75 = arith.constant 0 : index
    %c0_76 = arith.constant 0 : index
    %174 = vector.load %arg20[%c0_75, %c0_76] : memref<1x64xf32, #tpu.memory_space<vmem>>, vector<1x64xf32>
    %175 = vector.broadcast %174 : vector<1x64xf32> to vector<2x64xf32>
    %176 = arith.mulf %169, %175 : vector<2x64xf32>
    %177 = arith.addf %168, %176 : vector<2x64xf32>
    %178 = tpu.concatenate %173, %177 in 1 : vector<2x64xf32>, vector<2x64xf32> -> vector<2x128xf32>
    %179 = arith.truncf %178 : vector<2x128xf32> to vector<2x128xbf16>
    %c0_77 = arith.constant 0 : index
    %c0_78 = arith.constant 0 : index
    %180 = vector.load %arg21[%c0_77, %c0_78] : memref<128x192xbf16, #tpu.memory_space<vmem>>, vector<128x192xbf16>
    %cst_79 = arith.constant dense<0.000000e+00> : vector<2x192xf32>
    %181 = tpu.matmul %179, %180, %cst_79 {dimension_numbers = #tpu.dot_dimension_numbers<[1], [0], [0], [1], [0, 0, 1, 1], [], []>} : vector<2x128xbf16>, vector<128x192xbf16>, vector<2x192xf32> -> vector<2x192xf32>
    %182 = vector.extract_strided_slice %181 {offsets = [0, 0], sizes = [2, 128], strides = [1, 1]} : vector<2x192xf32> to vector<2x128xf32>
    %cst_80 = arith.constant 0.000000e+00 : f32
    %183 = vector.broadcast %cst_80 : f32 to vector<2x128xf32>
    %184 = arith.maximumf %182, %183 : vector<2x128xf32>
    %185 = arith.mulf %184, %184 : vector<2x128xf32>
    %186 = vector.extract_strided_slice %181 {offsets = [0, 128], sizes = [2, 64], strides = [1, 1]} : vector<2x192xf32> to vector<2x64xf32>
    %187 = arith.negf %186 : vector<2x64xf32>
    %188 = math.exp %187 : vector<2x64xf32>
    %cst_81 = arith.constant 1.000000e+00 : f32
    %189 = vector.broadcast %cst_81 : f32 to vector<2x64xf32>
    %190 = arith.addf %189, %188 : vector<2x64xf32>
    %191 = arith.divf %189, %190 : vector<2x64xf32>
    %192 = arith.truncf %185 : vector<2x128xf32> to vector<2x128xbf16>
    %c0_82 = arith.constant 0 : index
    %c0_83 = arith.constant 0 : index
    %193 = vector.load %arg22[%c0_82, %c0_83] : memref<128x64xbf16, #tpu.memory_space<vmem>>, vector<128x64xbf16>
    %cst_84 = arith.constant dense<0.000000e+00> : vector<2x64xf32>
    %194 = tpu.matmul %192, %193, %cst_84 {dimension_numbers = #tpu.dot_dimension_numbers<[1], [0], [0], [1], [0, 0, 1, 1], [], []>} : vector<2x128xbf16>, vector<128x64xbf16>, vector<2x64xf32> -> vector<2x64xf32>
    %195 = arith.mulf %191, %194 : vector<2x64xf32>
    %196 = arith.addf %146, %195 : vector<2x64xf32>
    %c0_85 = arith.constant 0 : index
    %c0_86 = arith.constant 0 : index
    %197 = vector.load %arg25[%c0_85, %c0_86] : memref<2x64xf32, #tpu.memory_space<vmem>>, vector<2x64xf32>
    tpu.vector_store %arg25[%c0_85, %c0_86], %196 {strides = array<i32>} : memref<2x64xf32, #tpu.memory_space<vmem>>, vector<2x64xf32>,
    %198 = vector.shape_cast %51 : vector<2x64xf32> to vector<2x1x64xf32>
    %c0_87 = arith.constant 0 : index
    %c0_88 = arith.constant 0 : index
    %c0_89 = arith.constant 0 : index
    %199 = vector.load %arg26[%c0_87, %c0_88, %c0_89] : memref<2x18x64xf32, #tpu.memory_space<vmem>>, vector<2x1x64xf32>
    tpu.vector_store %arg26[%c0_87, %c0_88, %c0_89], %198 {strides = array<i32>} : memref<2x18x64xf32, #tpu.memory_space<vmem>>, vector<2x1x64xf32>,
    %200 = vector.shape_cast %168 : vector<2x64xf32> to vector<2x1x64xf32>
    %c0_90 = arith.constant 0 : index
    %c1 = arith.constant 1 : index
    %c0_91 = arith.constant 0 : index
    %201 = vector.load %arg26[%c0_90, %c1, %c0_91] : memref<2x18x64xf32, #tpu.memory_space<vmem>>, vector<2x1x64xf32>
    tpu.vector_store %arg26[%c0_90, %c1, %c0_91], %200 {strides = array<i32>} : memref<2x18x64xf32, #tpu.memory_space<vmem>>, vector<2x1x64xf32>,
    return
  }
}

</mosaic_0001>

<llo_original>
// kernel: block_forward.1
$region0: #{block_forward.1}
  #allocation0 [shape = 'u32[]', space=smem, size = 0x4, offset = 0x4, fixed_abs, tag = 'smem constant byte address 0x4 - core index']
  #allocation1 [shape = 'u32[144,128]{1,0:T(1,128)}', space=vmem, size = 0x12000, scoped, tag = 'internal scratch']
  %s0 = inlined_call_operand.vmem [shape: f32[2,64], index: 0, kind: input, shape index: {}]
  %s1 = inlined_call_operand.vmem [shape: f32[2,18,64], index: 1, kind: input, shape index: {}]
  %s2 = inlined_call_operand.vmem [shape: f32[1,64], index: 2, kind: input, shape index: {}, may-alias: {2,4,6}]
  %s3 = inlined_call_operand.vmem [shape: f32[1,64], index: 3, kind: input, shape index: {}, may-alias: {3,5,7}]
  %s4 = inlined_call_operand.vmem [shape: f32[1,64], index: 4, kind: input, shape index: {}, may-alias: {2,4,6}]
  %s5 = inlined_call_operand.vmem [shape: f32[1,64], index: 5, kind: input, shape index: {}, may-alias: {3,5,7}]
  %s6 = inlined_call_operand.vmem [shape: f32[1,64], index: 6, kind: input, shape index: {}, may-alias: {2,4,6}]
  %s7 = inlined_call_operand.vmem [shape: f32[1,64], index: 7, kind: input, shape index: {}, may-alias: {3,5,7}]
  %s8 = inlined_call_operand.vmem [shape: f32[1,64], index: 8, kind: input, shape index: {}]
  %s9 = inlined_call_operand.vmem [shape: f32[1,64], index: 9, kind: input, shape index: {}]
  %s10 = inlined_call_operand.vmem [shape: f32[1,64], index: 10, kind: input, shape index: {}]
  %s11 = inlined_call_operand.vmem [shape: f32[1,320], index: 11, kind: input, shape index: {}]
  %s12 = inlined_call_operand.vmem [shape: bf16[64,80], index: 12, kind: input, shape index: {}]
  %s13 = inlined_call_operand.vmem [shape: bf16[80,320], index: 13, kind: input, shape index: {}]
  %s14 = inlined_call_operand.vmem [shape: bf16[320,288], index: 14, kind: input, shape index: {}]
  %s15 = inlined_call_operand.vmem [shape: f32[1,64], index: 15, kind: input, shape index: {}]
  %s16 = inlined_call_operand.vmem [shape: bf16[32,64], index: 16, kind: input, shape index: {}]
  %s17 = inlined_call_operand.vmem [shape: f32[1,64], index: 17, kind: input, shape index: {}]
  %s18 = inlined_call_operand.vmem [shape: bf16[64,64], index: 18, kind: input, shape index: {}]
  %s19 = inlined_call_operand.vmem [shape: f32[1,64], index: 19, kind: input, shape index: {}]
  %s20 = inlined_call_operand.vmem [shape: f32[1,64], index: 20, kind: input, shape index: {}]
  %s21 = inlined_call_operand.vmem [shape: bf16[128,192], index: 21, kind: input, shape index: {}]
  %s22 = inlined_call_operand.vmem [shape: bf16[128,64], index: 22, kind: input, shape index: {}]
  %s23 = inlined_call_operand.vmem [shape: f32[64,64], index: 23, kind: input, shape index: {}]
  %s24 = inlined_call_operand.vmem [shape: f32[16,64], index: 24, kind: input, shape index: {}]
  %s25 = inlined_call_operand.hbm [shape: f32[2,64], index: 25, kind: output, shape index: {0}]
  %s26 = inlined_call_operand.vmem [shape: f32[2,18,64], index: 26, kind: output, shape index: {1}]
  %27 = xla_tuple %s25, %s26
  %s28 = sld [smem:[#allocation0]]
  $region118: #{block_forward.1} parent=0
    _
  %s30 = ssub.s32 1, %s28
  %s31 = scalar_select 0, %s30, %s28
  $region1: #{block_forward.1} parent=0
    #allocation2 [shape = 'u8[1024]{0}', space=vmem, size = 0x400, scoped, tag = 'output window, operand 0, single buffered']
    #allocation3 [shape = 's32[1]{0}', space=sflag, size = 0x4, scoped, tag = 'scoped memory for block_forward.1']
    %32 = vsyncpa [#allocation3], 0
    // Predicated region
    $region2: #{block_forward.1} parent=1 // pred_check
      _
    $region3: #{block_forward.1} parent=1 // pred_check_branch
      %34 = sbr.rel (0) target = $region5
    $region4: #{block_forward.1} parent=1 // pred_region
      _
    $region5: #{block_forward.1} parent=1 // pred_fallthru
      _
    // Predicated region
    $region6: #{block_forward.1} parent=1 // pred_check
      _
    $region7: #{block_forward.1} parent=1 // pred_check_branch
      %36 = sbr.rel (0) target = $region9
    $region8: #{block_forward.1} parent=1 // pred_region
      _
    $region9: #{block_forward.1} parent=1 // pred_fallthru
      _
    // Predicated region
    $region10: #{block_forward.1} parent=1 // pred_check
      _
    $region11: #{block_forward.1} parent=1 // pred_check_branch
      %38 = sbr.rel (0) target = $region13
    $region12: #{block_forward.1} parent=1 // pred_region
      _
    $region13: #{block_forward.1} parent=1 // pred_fallthru
      _
    // Predicated region
    $region14: #{block_forward.1} parent=1 // pred_check
      _
    $region15: #{block_forward.1} parent=1 // pred_check_branch
      %40 = sbr.rel (0) target = $region17
    $region16: #{block_forward.1} parent=1 // pred_region
      _
    $region17: #{block_forward.1} parent=1 // pred_fallthru
      _
    // Predicated region
    $region18: #{block_forward.1} parent=1 // pred_check
      _
    $region19: #{block_forward.1} parent=1 // pred_check_branch
      %42 = sbr.rel (0) target = $region21
    $region20: #{block_forward.1} parent=1 // pred_region
      _
    $region21: #{block_forward.1} parent=1 // pred_fallthru
      _
    // Predicated region
    $region22: #{block_forward.1} parent=1 // pred_check
      _
    $region23: #{block_forward.1} parent=1 // pred_check_branch
      %44 = sbr.rel (0) target = $region25
    $region24: #{block_forward.1} parent=1 // pred_region
      _
    $region25: #{block_forward.1} parent=1 // pred_fallthru
      _
    // Predicated region
    $region26: #{block_forward.1} parent=1 // pred_check
      _
    $region27: #{block_forward.1} parent=1 // pred_check_branch
      %46 = sbr.rel (0) target = $region29
    $region28: #{block_forward.1} parent=1 // pred_region
      _
    $region29: #{block_forward.1} parent=1 // pred_fallthru
      _
    // Predicated region
    $region30: #{block_forward.1} parent=1 // pred_check
      _
    $region31: #{block_forward.1} parent=1 // pred_check_branch
      %48 = sbr.rel (0) target = $region33
    $region32: #{block_forward.1} parent=1 // pred_region
      _
    $region33: #{block_forward.1} parent=1 // pred_fallthru
      _
    // Predicated region
    $region34: #{block_forward.1} parent=1 // pred_check
      _
    $region35: #{block_forward.1} parent=1 // pred_check_branch
      %50 = sbr.rel (0) target = $region37
    $region36: #{block_forward.1} parent=1 // pred_region
      _
    $region37: #{block_forward.1} parent=1 // pred_fallthru
      _
    // Predicated region
    $region38: #{block_forward.1} parent=1 // pred_check
      _
    $region39: #{block_forward.1} parent=1 // pred_check_branch
      %52 = sbr.rel (0) target = $region41
    $region40: #{block_forward.1} parent=1 // pred_region
      _
    $region41: #{block_forward.1} parent=1 // pred_fallthru
      _
    // Predicated region
    $region42: #{block_forward.1} parent=1 // pred_check
      _
    $region43: #{block_forward.1} parent=1 // pred_check_branch
      %54 = sbr.rel (0) target = $region45
    $region44: #{block_forward.1} parent=1 // pred_region
      _
    $region45: #{block_forward.1} parent=1 // pred_fallthru
      _
    // Predicated region
    $region46: #{block_forward.1} parent=1 // pred_check
      _
    $region47: #{block_forward.1} parent=1 // pred_check_branch
      %56 = sbr.rel (0) target = $region49
    $region48: #{block_forward.1} parent=1 // pred_region
      _
    $region49: #{block_forward.1} parent=1 // pred_fallthru
      _
    // Predicated region
    $region50: #{block_forward.1} parent=1 // pred_check
      _
    $region51: #{block_forward.1} parent=1 // pred_check_branch
      %58 = sbr.rel (0) target = $region53
    $region52: #{block_forward.1} parent=1 // pred_region
      _
    $region53: #{block_forward.1} parent=1 // pred_fallthru
      _
    // Predicated region
    $region54: #{block_forward.1} parent=1 // pred_check
      _
    $region55: #{block_forward.1} parent=1 // pred_check_branch
      %60 = sbr.rel (0) target = $region57
    $region56: #{block_forward.1} parent=1 // pred_region
      _
    $region57: #{block_forward.1} parent=1 // pred_fallthru
      _
    // Predicated region
    $region58: #{block_forward.1} parent=1 // pred_check
      _
    $region59: #{block_forward.1} parent=1 // pred_check_branch
      %62 = sbr.rel (0) target = $region61
    $region60: #{block_forward.1} parent=1 // pred_region
      _
    $region61: #{block_forward.1} parent=1 // pred_fallthru
      _
    // Predicated region
    $region62: #{block_forward.1} parent=1 // pred_check
      _
    $region63: #{block_forward.1} parent=1 // pred_check_branch
      %64 = sbr.rel (0) target = $region65
    $region64: #{block_forward.1} parent=1 // pred_region
      _
    $region65: #{block_forward.1} parent=1 // pred_fallthru
      _
    // Predicated region
    $region66: #{block_forward.1} parent=1 // pred_check
      _
    $region67: #{block_forward.1} parent=1 // pred_check_branch
      %66 = sbr.rel (0) target = $region69
    $region68: #{block_forward.1} parent=1 // pred_region
      _
    $region69: #{block_forward.1} parent=1 // pred_fallthru
      _
    // Predicated region
    $region70: #{block_forward.1} parent=1 // pred_check
      _
    $region71: #{block_forward.1} parent=1 // pred_check_branch
      %68 = sbr.rel (0) target = $region73
    $region72: #{block_forward.1} parent=1 // pred_region
      _
    $region73: #{block_forward.1} parent=1 // pred_fallthru
      _
    // Predicated region
    $region74: #{block_forward.1} parent=1 // pred_check
      _
    $region75: #{block_forward.1} parent=1 // pred_check_branch
      %70 = sbr.rel (0) target = $region77
    $region76: #{block_forward.1} parent=1 // pred_region
      _
    $region77: #{block_forward.1} parent=1 // pred_fallthru
      _
    // Predicated region
    $region78: #{block_forward.1} parent=1 // pred_check
      _
    $region79: #{block_forward.1} parent=1 // pred_check_branch
      %72 = sbr.rel (0) target = $region81
    $region80: #{block_forward.1} parent=1 // pred_region
      _
    $region81: #{block_forward.1} parent=1 // pred_fallthru
      _
    // Predicated region
    $region82: #{block_forward.1} parent=1 // pred_check
      _
    $region83: #{block_forward.1} parent=1 // pred_check_branch
      %74 = sbr.rel (0) target = $region85
    $region84: #{block_forward.1} parent=1 // pred_region
      _
    $region85: #{block_forward.1} parent=1 // pred_fallthru
      _
    // Predicated region
    $region86: #{block_forward.1} parent=1 // pred_check
      _
    $region87: #{block_forward.1} parent=1 // pred_check_branch
      %76 = sbr.rel (0) target = $region89
    $region88: #{block_forward.1} parent=1 // pred_region
      _
    $region89: #{block_forward.1} parent=1 // pred_fallthru
      _
    // Predicated region
    $region90: #{block_forward.1} parent=1 // pred_check
      _
    $region91: #{block_forward.1} parent=1 // pred_check_branch
      %78 = sbr.rel (0) target = $region93
    $region92: #{block_forward.1} parent=1 // pred_region
      _
    $region93: #{block_forward.1} parent=1 // pred_fallthru
      _
    // Predicated region
    $region94: #{block_forward.1} parent=1 // pred_check
      _
    $region95: #{block_forward.1} parent=1 // pred_check_branch
      %80 = sbr.rel (0) target = $region97
    $region96: #{block_forward.1} parent=1 // pred_region
      _
    $region97: #{block_forward.1} parent=1 // pred_fallthru
      _
    // Predicated region
    $region98: #{block_forward.1} parent=1 // pred_check
      _
    $region99: #{block_forward.1} parent=1 // pred_check_branch
      %82 = sbr.rel (0) target = $region101
    $region100: #{block_forward.1} parent=1 // pred_region
      _
    $region101: #{block_forward.1} parent=1 // pred_fallthru
      _
    %v84 = vld [vmem:[%s0] sm:$0x3]
    %v85 = vld [vmem:[%s1] sm:$0xff]
    %v86 = vld [vmem:[%s1 + $0x8] sm:$0xff]
    %v87 = vld [vmem:[%s1 + $0x10] sm:$0x3]
    %v88 = vld [vmem:[%s1 + $0x18] sm:$0xff]
    %v89 = vld [vmem:[%s1 + $0x20] sm:$0xff]
    %v90 = vld [vmem:[%s1 + $0x28] sm:$0x3]
    %v91 = vld [vmem:[%s23] sm:$0xff]
    %v92 = vld [vmem:[%s23 + $0x8] sm:$0xff]
    %v93 = vld [vmem:[%s23 + $0x10] sm:$0xff]
    %v94 = vld [vmem:[%s23 + $0x18] sm:$0xff]
    %v95 = vld [vmem:[%s23 + $0x20] sm:$0xff]
    %v96 = vld [vmem:[%s23 + $0x28] sm:$0xff]
    %v97 = vld [vmem:[%s23 + $0x30] sm:$0xff]
    %v98 = vld [vmem:[%s23 + $0x38] sm:$0xff]
    %v99 = vld [vmem:[%s2] sm:$0x1]
    %v100 = vld [vmem:[%s3] sm:$0x1]
    %vm101 = vcmask 517120
    %v102 = vsel %vm101, %v84, 0.0
    %103 = vadd.xlane.f32.xlu0 %v102
    %v104 = vpop.xlane.xlu0 %103
    %v105 = vrcp.pop 64.0
    %v106 = vmul.f32 %v104, %v105
    %v107 = vsub.f32 %v84, %v106
    %v108 = vmul.f32 %v107, %v107
    %v109 = vsel %vm101, %v108, 0.0
    %110 = vadd.xlane.f32.xlu0 %v109
    %v111 = vpop.xlane.xlu0 %110
    %v112 = vmul.f32 %v111, %v105
    %v113 = vadd.f32 %v112, 1e-05
    %v114 = vrsqrt.pop %v113
    %v115 = vmul.f32 %v107, %v114
    %v117 = vlaneseq
    %v118 = vshrl.u32 %v117, 7
    %v119 = vsub.s32 0, %v118
    %v120 = vrot.slane %v99, %v119
    %v122 = vmul.f32 %v115, %v120
    %v124 = vlaneseq
    %v125 = vshrl.u32 %v124, 7
    %v126 = vsub.s32 0, %v125
    %v127 = vrot.slane %v100, %v126
    %v129 = vadd.f32 %v122, %v127
    %v130 = vld [vmem:[%s4] sm:$0x1]
    %v131 = vld [vmem:[%s5] sm:$0x1]
    %v132 = vsel %vm101, %v129, 0.0
    %133 = vadd.xlane.f32.xlu0 %v132
    %v134 = vpop.xlane.xlu0 %133
    %v135 = vmul.f32 %v134, %v105
    %v136 = vsub.f32 %v129, %v135
    %v137 = vmul.f32 %v136, %v136
    %v138 = vsel %vm101, %v137, 0.0
    %139 = vadd.xlane.f32.xlu0 %v138
    %v140 = vpop.xlane.xlu0 %139
    %v141 = vmul.f32 %v140, %v105
    %v142 = vadd.f32 %v141, 1e-05
    %v143 = vrsqrt.pop %v142
    %v144 = vmul.f32 %v136, %v143
    %v146 = vlaneseq
    %v147 = vshrl.u32 %v146, 7
    %v148 = vsub.s32 0, %v147
    %v149 = vrot.slane %v130, %v148
    %v151 = vmul.f32 %v144, %v149
    %v153 = vlaneseq
    %v154 = vshrl.u32 %v153, 7
    %v155 = vsub.s32 0, %v154
    %v156 = vrot.slane %v131, %v155
    %v158 = vadd.f32 %v151, %v156
    %v160 = vrot.slane %v158, 1
    %v163 = vsub.f32 %v85, %v158
    %v164 = vsub.f32 %v88, %v160
    %v165 = vld [vmem:[%s10] sm:$0x1]
    %v167 = vlaneseq
    %v168 = vshrl.u32 %v167, 7
    %v169 = vsub.s32 0, %v168
    %v170 = vrot.slane %v165, %v169
    %v172 = vmul.f32 %v163, %v170
    %v173 = vmul.f32 %v164, %v170
    %v176 = vrot.slane %v173, 7
    %vm177 = vcmask 1041409
    %v178 = vsel %vm177, %v176, %v172
    %v180 = vadd.f32 %v158, %v178
    %v181 = vpack.c.bf16 %v180, %v180
    %v182 = vld [vmem:[%s12] sm:$0xf]
    %v183 = vld [vmem:[%s12 + $0x4] sm:$0xf]
    %v184 = vld [vmem:[%s12 + $0x8] sm:$0xf]
    %v185 = vld [vmem:[%s12 + $0xc] sm:$0xf]
    %v186 = vld [vmem:[%s12 + $0x10] sm:$0xf]
    %v187 = vld [vmem:[%s12 + $0x14] sm:$0xf]
    %v188 = vld [vmem:[%s12 + $0x18] sm:$0xf]
    %v189 = vld [vmem:[%s12 + $0x1c] sm:$0xf]
    %v198 = vunpack.c.l.b16 %v182
    %v199 = vunpack.c.l.b16 %v183
    %v200 = vunpack.c.l.b16 %v184
    %v201 = vunpack.c.l.b16 %v185
    %v202 = vunpack.c.l.b16 %v186
    %v203 = vunpack.c.l.b16 %v187
    %v204 = vunpack.c.l.b16 %v188
    %v205 = vunpack.c.l.b16 %v189
    %v206 = vpack.c.b16 %v199, %v198
    %v207 = vpack.c.b16 %v201, %v200
    %v208 = vpack.c.b16 %v203, %v202
    %v209 = vpack.c.b16 %v205, %v204
    %vm214 = vcmask 523264
    %v216 = vsel %vm214, %v181, 0
    %218 = vmatprep.subr.bf16.mxu0 0
    %219 = vmatpush1.bf16.msra.mxu0 %v206
    %220 = vmatprep.subr.bf16.mxu0 0
    %221 = vmatpush1.bf16.msra.mxu0 %v207
    %222 = vmatprep.subr.bf16.mxu0 0
    %223 = vmatpush1.bf16.msra.mxu0 %v208
    %224 = vmatprep.subr.bf16.mxu0 0
    %225 = vmatpush1.bf16.msra.mxu0 %v209
    %226 = vmatprep.subr.bf16.mxu0 0
    %227 = vmatpush1.bf16.msra.mxu0 0
    %228 = vmatprep.subr.bf16.mxu0 0
    %229 = vmatpush1.bf16.msra.mxu0 0
    %230 = vmatprep.subr.bf16.mxu0 0
    %231 = vmatpush1.bf16.msra.mxu0 0
    %232 = vmatprep.subr.bf16.mxu0 0
    %233 = vmatpush1.bf16.msra.mxu0 0
    %234 = vmatprep.subr.bf16.mxu0 0
    %235 = vmatpush1.bf16.msra.mxu0 0
    %236 = vmatprep.subr.bf16.mxu0 0
    %237 = vmatpush1.bf16.msra.mxu0 0
    %238 = vmatprep.subr.bf16.mxu0 0
    %239 = vmatpush1.bf16.msra.mxu0 0
    %240 = vmatprep.subr.bf16.mxu0 0
    %241 = vmatpush1.bf16.msra.mxu0 0
    %242 = vmatprep.subr.bf16.mxu0 0
    %243 = vmatpush1.bf16.msra.mxu0 0
    %244 = vmatprep.subr.bf16.mxu0 0
    %245 = vmatpush1.bf16.msra.mxu0 0
    %246 = vmatprep.subr.bf16.mxu0 0
    %247 = vmatpush1.bf16.msra.mxu0 0
    %248 = vmatprep.subr.bf16.mxu0 0
    %249 = vmatpush1.bf16.msra.mxu0 0
    %250 = vmatprep.mubr.bf16.mxu0 0
    %251 = vmatmul.mubr.bf16.gmra.mrb[0].mxu0 %v216
    %v252 = vpop.f32.mrb[0].mxu0
    %v253 = vadd.f32 0.0, %v252
    %v254 = vpop.f32.mrb[0].mxu0
    %v255 = vpop.f32.mrb[0].mxu0
    %v256 = vpop.f32.mrb[0].mxu0
    %257 = vdwg.mxu0
    %v258 = vtanh.pop %v253
    %v259 = vpack.c.bf16 %v258, %v258
    %v260 = vld [vmem:[%s13] sm:$0xff]
    %v261 = vld [vmem:[%s13 + $0x8] sm:$0xf]
    %v262 = vld [vmem:[%s13 + $0xc] sm:$0xff]
    %v263 = vld [vmem:[%s13 + $0x14] sm:$0xf]
    %v264 = vld [vmem:[%s13 + $0x18] sm:$0xff]
    %v265 = vld [vmem:[%s13 + $0x20] sm:$0xf]
    %v266 = vld [vmem:[%s13 + $0x24] sm:$0xff]
    %v267 = vld [vmem:[%s13 + $0x2c] sm:$0xf]
    %v268 = vld [vmem:[%s13 + $0x30] sm:$0xff]
    %v269 = vld [vmem:[%s13 + $0x38] sm:$0xf]
    %v270 = vld [vmem:[%s13 + $0x3c] sm:$0xff]
    %v271 = vld [vmem:[%s13 + $0x44] sm:$0xf]
    %v272 = vld [vmem:[%s13 + $0x48] sm:$0xff]
    %v273 = vld [vmem:[%s13 + $0x50] sm:$0xf]
    %v274 = vld [vmem:[%s13 + $0x54] sm:$0xff]
    %v275 = vld [vmem:[%s13 + $0x5c] sm:$0xf]
    %v276 = vld [vmem:[%s13 + $0x60] sm:$0xff]
    %v277 = vld [vmem:[%s13 + $0x68] sm:$0xf]
    %v278 = vld [vmem:[%s13 + $0x6c] sm:$0xff]
    %v279 = vld [vmem:[%s13 + $0x74] sm:$0xf]
    %v300 = vunpack.c.l.b16 %v260
    %v301 = vunpack.c.h.b16 %v260
    %v302 = vunpack.c.l.b16 %v261
    %v303 = vunpack.c.l.b16 %v262
    %v304 = vunpack.c.h.b16 %v262
    %v305 = vunpack.c.l.b16 %v263
    %v306 = vunpack.c.l.b16 %v264
    %v307 = vunpack.c.h.b16 %v264
    %v308 = vunpack.c.l.b16 %v265
    %v309 = vunpack.c.l.b16 %v266
    %v310 = vunpack.c.h.b16 %v266
    %v311 = vunpack.c.l.b16 %v267
    %v312 = vunpack.c.l.b16 %v268
    %v313 = vunpack.c.h.b16 %v268
    %v314 = vunpack.c.l.b16 %v269
    %v315 = vunpack.c.l.b16 %v270
    %v316 = vunpack.c.h.b16 %v270
    %v317 = vunpack.c.l.b16 %v271
    %v318 = vunpack.c.l.b16 %v272
    %v319 = vunpack.c.h.b16 %v272
    %v320 = vunpack.c.l.b16 %v273
    %v321 = vunpack.c.l.b16 %v274
    %v322 = vunpack.c.h.b16 %v274
    %v323 = vunpack.c.l.b16 %v275
    %v324 = vunpack.c.l.b16 %v276
    %v325 = vunpack.c.h.b16 %v276
    %v326 = vunpack.c.l.b16 %v277
    %v327 = vunpack.c.l.b16 %v278
    %v328 = vunpack.c.h.b16 %v278
    %v329 = vunpack.c.l.b16 %v279
    %v330 = vpack.c.b16 %v303, %v300
    %v331 = vpack.c.b16 %v304, %v301
    %v332 = vpack.c.b16 %v305, %v302
    %v333 = vpack.c.b16 %v309, %v306
    %v334 = vpack.c.b16 %v310, %v307
    %v335 = vpack.c.b16 %v311, %v308
    %v336 = vpack.c.b16 %v315, %v312
    %v337 = vpack.c.b16 %v316, %v313
    %v338 = vpack.c.b16 %v317, %v314
    %v339 = vpack.c.b16 %v321, %v318
    %v340 = vpack.c.b16 %v322, %v319
    %v341 = vpack.c.b16 %v323, %v320
    %v342 = vpack.c.b16 %v327, %v324
    %v343 = vpack.c.b16 %v328, %v325
    %v344 = vpack.c.b16 %v329, %v326
    %vm360 = vcmask 654336
    %v362 = vsel %vm360, %v259, 0
    %364 = vmatprep.subr.bf16.mxu0 %v331
    %365 = vmatpush1.bf16.msra.mxu0 %v330
    %366 = vmatprep.subr.bf16.mxu0 %v334
    %367 = vmatpush1.bf16.msra.mxu0 %v333
    %368 = vmatprep.subr.bf16.mxu0 %v337
    %369 = vmatpush1.bf16.msra.mxu0 %v336
    %370 = vmatprep.subr.bf16.mxu0 %v340
    %371 = vmatpush1.bf16.msra.mxu0 %v339
    %372 = vmatprep.subr.bf16.mxu0 %v343
    %373 = vmatpush1.bf16.msra.mxu0 %v342
    %374 = vmatprep.subr.bf16.mxu0 0
    %375 = vmatpush1.bf16.msra.mxu0 0
    %376 = vmatprep.subr.bf16.mxu0 0
    %377 = vmatpush1.bf16.msra.mxu0 0
    %378 = vmatprep.subr.bf16.mxu0 0
    %379 = vmatpush1.bf16.msra.mxu0 0
    %380 = vmatprep.subr.bf16.mxu0 0
    %381 = vmatpush1.bf16.msra.mxu0 0
    %382 = vmatprep.subr.bf16.mxu0 0
    %383 = vmatpush1.bf16.msra.mxu0 0
    %384 = vmatprep.subr.bf16.mxu0 0
    %385 = vmatpush1.bf16.msra.mxu0 0
    %386 = vmatprep.subr.bf16.mxu0 0
    %387 = vmatpush1.bf16.msra.mxu0 0
    %388 = vmatprep.subr.bf16.mxu0 0
    %389 = vmatpush1.bf16.msra.mxu0 0
    %390 = vmatprep.subr.bf16.mxu0 0
    %391 = vmatpush1.bf16.msra.mxu0 0
    %392 = vmatprep.subr.bf16.mxu0 0
    %393 = vmatpush1.bf16.msra.mxu0 0
    %394 = vmatprep.subr.bf16.mxu0 0
    %395 = vmatpush1.bf16.msra.mxu0 0
    %396 = vmatprep.mubr.bf16.mxu0 0
    %397 = vmatmul.mubr.bf16.gmra.mrb[0].mxu0 %v362
    %v398 = vpop.f32.mrb[0].mxu0
    %v399 = vadd.f32 0.0, %v398
    %v400 = vpop.f32.mrb[0].mxu0
    %v401 = vadd.f32 0.0, %v400
    %v402 = vpop.f32.mrb[0].mxu0
    %v403 = vpop.f32.mrb[0].mxu0
    %404 = vdwg.mxu0
    %405 = vmatprep.subr.bf16.mxu0 0
    %406 = vmatpush1.bf16.msra.mxu0 %v332
    %407 = vmatprep.subr.bf16.mxu0 0
    %408 = vmatpush1.bf16.msra.mxu0 %v335
    %409 = vmatprep.subr.bf16.mxu0 0
    %410 = vmatpush1.bf16.msra.mxu0 %v338
    %411 = vmatprep.subr.bf16.mxu0 0
    %412 = vmatpush1.bf16.msra.mxu0 %v341
    %413 = vmatprep.subr.bf16.mxu0 0
    %414 = vmatpush1.bf16.msra.mxu0 %v344
    %415 = vmatprep.subr.bf16.mxu0 0
    %416 = vmatpush1.bf16.msra.mxu0 0
    %417 = vmatprep.subr.bf16.mxu0 0
    %418 = vmatpush1.bf16.msra.mxu0 0
    %419 = vmatprep.subr.bf16.mxu0 0
    %420 = vmatpush1.bf16.msra.mxu0 0
    %421 = vmatprep.subr.bf16.mxu0 0
    %422 = vmatpush1.bf16.msra.mxu0 0
    %423 = vmatprep.subr.bf16.mxu0 0
    %424 = vmatpush1.bf16.msra.mxu0 0
    %425 = vmatprep.subr.bf16.mxu0 0
    %426 = vmatpush1.bf16.msra.mxu0 0
    %427 = vmatprep.subr.bf16.mxu0 0
    %428 = vmatpush1.bf16.msra.mxu0 0
    %429 = vmatprep.subr.bf16.mxu0 0
    %430 = vmatpush1.bf16.msra.mxu0 0
    %431 = vmatprep.subr.bf16.mxu0 0
    %432 = vmatpush1.bf16.msra.mxu0 0
    %433 = vmatprep.subr.bf16.mxu0 0
    %434 = vmatpush1.bf16.msra.mxu0 0
    %435 = vmatprep.subr.bf16.mxu0 0
    %436 = vmatpush1.bf16.msra.mxu0 0
    %437 = vmatprep.mubr.bf16.mxu0 0
    %438 = vmatmul.mubr.bf16.gmra.mrb[0].mxu0 %v362
    %v439 = vpop.f32.mrb[0].mxu0
    %v440 = vadd.f32 0.0, %v439
    %v441 = vpop.f32.mrb[0].mxu0
    %v442 = vpop.f32.mrb[0].mxu0
    %v443 = vpop.f32.mrb[0].mxu0
    %444 = vdwg.mxu0
    %445 = vrot.lane.b32.xlu0 %v158, 64
    %v446 = vpop.permute.xlu0 %445
    %v448 = vsel %vm214, %v158, %v446
    %v451 = vrot.slane %v164, 7
    %v452 = vsel %vm177, %v451, %v163
    %454 = vrot.lane.b32.xlu0 %v452, 64
    %v455 = vpop.permute.xlu0 %454
    %v457 = vsel %vm214, %v452, %v455
    %v458 = vld [vmem:[%s11] sm:$0x7]
    %v460 = vlaneseq
    %v461 = vshrl.u32 %v460, 7
    %v462 = vsub.s32 0, %v461
    %v463 = vrot.slane %v458, %v462
    %v464 = vlaneseq
    %v465 = vshrl.u32 %v464, 7
    %v466 = vsub.s32 1, %v465
    %v467 = vrot.slane %v458, %v466
    %v468 = vlaneseq
    %v469 = vshrl.u32 %v468, 7
    %v470 = vsub.s32 2, %v469
    %v471 = vrot.slane %v458, %v470
    %v475 = vadd.f32 %v463, %v399
    %v476 = vadd.f32 %v467, %v401
    %v477 = vadd.f32 %v471, %v440
    %v478 = vmul.f32 %v457, %v475
    %v479 = vmul.f32 %v457, %v476
    %v480 = vmul.f32 %v452, %v477
    %v481 = vadd.f32 %v448, %v478
    %v482 = vadd.f32 %v448, %v479
    %v483 = vadd.f32 %v158, %v480
    %v484 = vpack.c.bf16 %v481, %v481
    %v485 = vpack.c.bf16 %v482, %v482
    %v486 = vpack.c.bf16 %v483, %v483
    %v487 = vld [vmem:[%s14] sm:$0xff]
    %v488 = vld [vmem:[%s14 + $0x8] sm:$0xf]
    %v489 = vld [vmem:[%s14 + $0xc] sm:$0xff]
    %v490 = vld [vmem:[%s14 + $0x14] sm:$0xf]
    %v491 = vld [vmem:[%s14 + $0x18] sm:$0xff]
    %v492 = vld [vmem:[%s14 + $0x20] sm:$0xf]
    %v493 = vld [vmem:[%s14 + $0x24] sm:$0xff]
    %v494 = vld [vmem:[%s14 + $0x2c] sm:$0xf]
    %v495 = vld [vmem:[%s14 + $0x30] sm:$0xff]
    %v496 = vld [vmem:[%s14 + $0x38] sm:$0xf]
    %v497 = vld [vmem:[%s14 + $0x3c] sm:$0xff]
    %v498 = vld [vmem:[%s14 + $0x44] sm:$0xf]
    %v499 = vld [vmem:[%s14 + $0x48] sm:$0xff]
    %v500 = vld [vmem:[%s14 + $0x50] sm:$0xf]
    %v501 = vld [vmem:[%s14 + $0x54] sm:$0xff]
    %v502 = vld [vmem:[%s14 + $0x5c] sm:$0xf]
    %v503 = vld [vmem:[%s14 + $0x60] sm:$0xff]
    %v504 = vld [vmem:[%s14 + $0x68] sm:$0xf]
    %v505 = vld [vmem:[%s14 + $0x6c] sm:$0xff]
    %v506 = vld [vmem:[%s14 + $0x74] sm:$0xf]
    %v507 = vld [vmem:[%s14 + $0x78] sm:$0xff]
    %v508 = vld [vmem:[%s14 + $0x80] sm:$0xf]
    %v509 = vld [vmem:[%s14 + $0x84] sm:$0xff]
    %v510 = vld [vmem:[%s14 + $0x8c] sm:$0xf]
    %v511 = vld [vmem:[%s14 + $0x90] sm:$0xff]
    %v512 = vld [vmem:[%s14 + $0x98] sm:$0xf]
    %v513 = vld [vmem:[%s14 + $0x9c] sm:$0xff]
    %v514 = vld [vmem:[%s14 + $0xa4] sm:$0xf]
    %v515 = vld [vmem:[%s14 + $0xa8] sm:$0xff]
    %v516 = vld [vmem:[%s14 + $0xb0] sm:$0xf]
    %v517 = vld [vmem:[%s14 + $0xb4] sm:$0xff]
    %v518 = vld [vmem:[%s14 + $0xbc] sm:$0xf]
    %v519 = vld [vmem:[%s14 + $0xc0] sm:$0xff]
    %v520 = vld [vmem:[%s14 + $0xc8] sm:$0xf]
    %v521 = vld [vmem:[%s14 + $0xcc] sm:$0xff]
    %v522 = vld [vmem:[%s14 + $0xd4] sm:$0xf]
    %v523 = vld [vmem:[%s14 + $0xd8] sm:$0xff]
    %v524 = vld [vmem:[%s14 + $0xe0] sm:$0xf]
    %v525 = vld [vmem:[%s14 + $0xe4] sm:$0xff]
    %v526 = vld [vmem:[%s14 + $0xec] sm:$0xf]
    %v527 = vld [vmem:[%s14 + $0xf0] sm:$0xff]
    %v528 = vld [vmem:[%s14 + $0xf8] sm:$0xf]
    %v529 = vld [vmem:[%s14 + $0xfc] sm:$0xff]
    %v530 = vld [vmem:[%s14 + $0x104] sm:$0xf]
    %v531 = vld [vmem:[%s14 + $0x108] sm:$0xff]
    %v532 = vld [vmem:[%s14 + $0x110] sm:$0xf]
    %v533 = vld [vmem:[%s14 + $0x114] sm:$0xff]
    %v534 = vld [vmem:[%s14 + $0x11c] sm:$0xf]
    %v535 = vld [vmem:[%s14 + $0x120] sm:$0xff]
    %v536 = vld [vmem:[%s14 + $0x128] sm:$0xf]
    %v537 = vld [vmem:[%s14 + $0x12c] sm:$0xff]
    %v538 = vld [vmem:[%s14 + $0x134] sm:$0xf]
    %v539 = vld [vmem:[%s14 + $0x138] sm:$0xff]
    %v540 = vld [vmem:[%s14 + $0x140] sm:$0xf]
    %v541 = vld [vmem:[%s14 + $0x144] sm:$0xff]
    %v542 = vld [vmem:[%s14 + $0x14c] sm:$0xf]
    %v543 = vld [vmem:[%s14 + $0x150] sm:$0xff]
    %v544 = vld [vmem:[%s14 + $0x158] sm:$0xf]
    %v545 = vld [vmem:[%s14 + $0x15c] sm:$0xff]
    %v546 = vld [vmem:[%s14 + $0x164] sm:$0xf]
    %v547 = vld [vmem:[%s14 + $0x168] sm:$0xff]
    %v548 = vld [vmem:[%s14 + $0x170] sm:$0xf]
    %v549 = vld [vmem:[%s14 + $0x174] sm:$0xff]
    %v550 = vld [vmem:[%s14 + $0x17c] sm:$0xf]
    %v551 = vld [vmem:[%s14 + $0x180] sm:$0xff]
    %v552 = vld [vmem:[%s14 + $0x188] sm:$0xf]
    %v553 = vld [vmem:[%s14 + $0x18c] sm:$0xff]
    %v554 = vld [vmem:[%s14 + $0x194] sm:$0xf]
    %v555 = vld [vmem:[%s14 + $0x198] sm:$0xff]
    %v556 = vld [vmem:[%s14 + $0x1a0] sm:$0xf]
    %v557 = vld [vmem:[%s14 + $0x1a4] sm:$0xff]
    %v558 = vld [vmem:[%s14 + $0x1ac] sm:$0xf]
    %v559 = vld [vmem:[%s14 + $0x1b0] sm:$0xff]
    %v560 = vld [vmem:[%s14 + $0x1b8] sm:$0xf]
    %v561 = vld [vmem:[%s14 + $0x1bc] sm:$0xff]
    %v562 = vld [vmem:[%s14 + $0x1c4] sm:$0xf]
    %v563 = vld [vmem:[%s14 + $0x1c8] sm:$0xff]
    %v564 = vld [vmem:[%s14 + $0x1d0] sm:$0xf]
    %v565 = vld [vmem:[%s14 + $0x1d4] sm:$0xff]
    %v566 = vld [vmem:[%s14 + $0x1dc] sm:$0xf]
    %v647 = vunpack.c.l.b16 %v487
    %v648 = vunpack.c.h.b16 %v487
    %v649 = vunpack.c.l.b16 %v488
    %v650 = vunpack.c.l.b16 %v489
    %v651 = vunpack.c.h.b16 %v489
    %v652 = vunpack.c.l.b16 %v490
    %v653 = vunpack.c.l.b16 %v491
    %v654 = vunpack.c.h.b16 %v491
    %v655 = vunpack.c.l.b16 %v492
    %v656 = vunpack.c.l.b16 %v493
    %v657 = vunpack.c.h.b16 %v493
    %v658 = vunpack.c.l.b16 %v494
    %v659 = vunpack.c.l.b16 %v495
    %v660 = vunpack.c.h.b16 %v495
    %v661 = vunpack.c.l.b16 %v496
    %v662 = vunpack.c.l.b16 %v497
    %v663 = vunpack.c.h.b16 %v497
    %v664 = vunpack.c.l.b16 %v498
    %v665 = vunpack.c.l.b16 %v499
    %v666 = vunpack.c.h.b16 %v499
    %v667 = vunpack.c.l.b16 %v500
    %v668 = vunpack.c.l.b16 %v501
    %v669 = vunpack.c.h.b16 %v501
    %v670 = vunpack.c.l.b16 %v502
    %v671 = vunpack.c.l.b16 %v503
    %v672 = vunpack.c.h.b16 %v503
    %v673 = vunpack.c.l.b16 %v504
    %v674 = vunpack.c.l.b16 %v505
    %v675 = vunpack.c.h.b16 %v505
    %v676 = vunpack.c.l.b16 %v506
    %v677 = vunpack.c.l.b16 %v507
    %v678 = vunpack.c.h.b16 %v507
    %v679 = vunpack.c.l.b16 %v508
    %v680 = vunpack.c.l.b16 %v509
    %v681 = vunpack.c.h.b16 %v509
    %v682 = vunpack.c.l.b16 %v510
    %v683 = vunpack.c.l.b16 %v511
    %v684 = vunpack.c.h.b16 %v511
    %v685 = vunpack.c.l.b16 %v512
    %v686 = vunpack.c.l.b16 %v513
    %v687 = vunpack.c.h.b16 %v513
    %v688 = vunpack.c.l.b16 %v514
    %v689 = vunpack.c.l.b16 %v515
    %v690 = vunpack.c.h.b16 %v515
    %v691 = vunpack.c.l.b16 %v516
    %v692 = vunpack.c.l.b16 %v517
    %v693 = vunpack.c.h.b16 %v517
    %v694 = vunpack.c.l.b16 %v518
    %v695 = vunpack.c.l.b16 %v519
    %v696 = vunpack.c.h.b16 %v519
    %v697 = vunpack.c.l.b16 %v520
    %v698 = vunpack.c.l.b16 %v521
    %v699 = vunpack.c.h.b16 %v521
    %v700 = vunpack.c.l.b16 %v522
    %v701 = vunpack.c.l.b16 %v523
    %v702 = vunpack.c.h.b16 %v523
    %v703 = vunpack.c.l.b16 %v524
    %v704 = vunpack.c.l.b16 %v525
    %v705 = vunpack.c.h.b16 %v525
    %v706 = vunpack.c.l.b16 %v526
    %v707 = vunpack.c.l.b16 %v527
    %v708 = vunpack.c.h.b16 %v527
    %v709 = vunpack.c.l.b16 %v528
    %v710 = vunpack.c.l.b16 %v529
    %v711 = vunpack.c.h.b16 %v529
    %v712 = vunpack.c.l.b16 %v530
    %v713 = vunpack.c.l.b16 %v531
    %v714 = vunpack.c.h.b16 %v531
    %v715 = vunpack.c.l.b16 %v532
    %v716 = vunpack.c.l.b16 %v533
    %v717 = vunpack.c.h.b16 %v533
    %v718 = vunpack.c.l.b16 %v534
    %v719 = vunpack.c.l.b16 %v535
    %v720 = vunpack.c.h.b16 %v535
    %v721 = vunpack.c.l.b16 %v536
    %v722 = vunpack.c.l.b16 %v537
    %v723 = vunpack.c.h.b16 %v537
    %v724 = vunpack.c.l.b16 %v538
    %v725 = vunpack.c.l.b16 %v539
    %v726 = vunpack.c.h.b16 %v539
    %v727 = vunpack.c.l.b16 %v540
    %v728 = vunpack.c.l.b16 %v541
    %v729 = vunpack.c.h.b16 %v541
    %v730 = vunpack.c.l.b16 %v542
    %v731 = vunpack.c.l.b16 %v543
    %v732 = vunpack.c.h.b16 %v543
    %v733 = vunpack.c.l.b16 %v544
    %v734 = vunpack.c.l.b16 %v545
    %v735 = vunpack.c.h.b16 %v545
    %v736 = vunpack.c.l.b16 %v546
    %v737 = vunpack.c.l.b16 %v547
    %v738 = vunpack.c.h.b16 %v547
    %v739 = vunpack.c.l.b16 %v548
    %v740 = vunpack.c.l.b16 %v549
    %v741 = vunpack.c.h.b16 %v549
    %v742 = vunpack.c.l.b16 %v550
    %v743 = vunpack.c.l.b16 %v551
    %v744 = vunpack.c.h.b16 %v551
    %v745 = vunpack.c.l.b16 %v552
    %v746 = vunpack.c.l.b16 %v553
    %v747 = vunpack.c.h.b16 %v553
    %v748 = vunpack.c.l.b16 %v554
    %v749 = vunpack.c.l.b16 %v555
    %v750 = vunpack.c.h.b16 %v555
    %v751 = vunpack.c.l.b16 %v556
    %v752 = vunpack.c.l.b16 %v557
    %v753 = vunpack.c.h.b16 %v557
    %v754 = vunpack.c.l.b16 %v558
    %v755 = vunpack.c.l.b16 %v559
    %v756 = vunpack.c.h.b16 %v559
    %v757 = vunpack.c.l.b16 %v560
    %v758 = vunpack.c.l.b16 %v561
    %v759 = vunpack.c.h.b16 %v561
    %v760 = vunpack.c.l.b16 %v562
    %v761 = vunpack.c.l.b16 %v563
    %v762 = vunpack.c.h.b16 %v563
    %v763 = vunpack.c.l.b16 %v564
    %v764 = vunpack.c.l.b16 %v565
    %v765 = vunpack.c.h.b16 %v565
    %v766 = vunpack.c.l.b16 %v566
    %v767 = vpack.c.b16 %v650, %v647
    %v768 = vpack.c.b16 %v651, %v648
    %v769 = vpack.c.b16 %v652, %v649
    %v770 = vpack.c.b16 %v656, %v653
    %v771 = vpack.c.b16 %v657, %v654
    %v772 = vpack.c.b16 %v658, %v655
    %v773 = vpack.c.b16 %v662, %v659
    %v774 = vpack.c.b16 %v663, %v660
    %v775 = vpack.c.b16 %v664, %v661
    %v776 = vpack.c.b16 %v668, %v665
    %v777 = vpack.c.b16 %v669, %v666
    %v778 = vpack.c.b16 %v670, %v667
    %v779 = vpack.c.b16 %v674, %v671
    %v780 = vpack.c.b16 %v675, %v672
    %v781 = vpack.c.b16 %v676, %v673
    %v782 = vpack.c.b16 %v680, %v677
    %v783 = vpack.c.b16 %v681, %v678
    %v784 = vpack.c.b16 %v682, %v679
    %v785 = vpack.c.b16 %v686, %v683
    %v786 = vpack.c.b16 %v687, %v684
    %v787 = vpack.c.b16 %v688, %v685
    %v788 = vpack.c.b16 %v692, %v689
    %v789 = vpack.c.b16 %v693, %v690
    %v790 = vpack.c.b16 %v694, %v691
    %v791 = vpack.c.b16 %v698, %v695
    %v792 = vpack.c.b16 %v699, %v696
    %v793 = vpack.c.b16 %v700, %v697
    %v794 = vpack.c.b16 %v704, %v701
    %v795 = vpack.c.b16 %v705, %v702
    %v796 = vpack.c.b16 %v706, %v703
    %v797 = vpack.c.b16 %v710, %v707
    %v798 = vpack.c.b16 %v711, %v708
    %v799 = vpack.c.b16 %v712, %v709
    %v800 = vpack.c.b16 %v716, %v713
    %v801 = vpack.c.b16 %v717, %v714
    %v802 = vpack.c.b16 %v718, %v715
    %v803 = vpack.c.b16 %v722, %v719
    %v804 = vpack.c.b16 %v723, %v720
    %v805 = vpack.c.b16 %v724, %v721
    %v806 = vpack.c.b16 %v728, %v725
    %v807 = vpack.c.b16 %v729, %v726
    %v808 = vpack.c.b16 %v730, %v727
    %v809 = vpack.c.b16 %v734, %v731
    %v810 = vpack.c.b16 %v735, %v732
    %v811 = vpack.c.b16 %v736, %v733
    %v812 = vpack.c.b16 %v740, %v737
    %v813 = vpack.c.b16 %v741, %v738
    %v814 = vpack.c.b16 %v742, %v739
    %v815 = vpack.c.b16 %v746, %v743
    %v816 = vpack.c.b16 %v747, %v744
    %v817 = vpack.c.b16 %v748, %v745
    %v818 = vpack.c.b16 %v752, %v749
    %v819 = vpack.c.b16 %v753, %v750
    %v820 = vpack.c.b16 %v754, %v751
    %v821 = vpack.c.b16 %v758, %v755
    %v822 = vpack.c.b16 %v759, %v756
    %v823 = vpack.c.b16 %v760, %v757
    %v824 = vpack.c.b16 %v764, %v761
    %v825 = vpack.c.b16 %v765, %v762
    %v826 = vpack.c.b16 %v766, %v763
    %v888 = vsel %vm214, %v486, 0
    %890 = vmatprep.subr.bf16.mxu0 %v768
    %891 = vmatpush1.bf16.msra.mxu0 %v767
    %892 = vmatprep.subr.bf16.mxu0 %v771
    %893 = vmatpush1.bf16.msra.mxu0 %v770
    %894 = vmatprep.subr.bf16.mxu0 %v774
    %895 = vmatpush1.bf16.msra.mxu0 %v773
    %896 = vmatprep.subr.bf16.mxu0 %v777
    %897 = vmatpush1.bf16.msra.mxu0 %v776
    %898 = vmatprep.subr.bf16.mxu0 %v780
    %899 = vmatpush1.bf16.msra.mxu0 %v779
    %900 = vmatprep.subr.bf16.mxu0 %v783
    %901 = vmatpush1.bf16.msra.mxu0 %v782
    %902 = vmatprep.subr.bf16.mxu0 %v786
    %903 = vmatpush1.bf16.msra.mxu0 %v785
    %904 = vmatprep.subr.bf16.mxu0 %v789
    %905 = vmatpush1.bf16.msra.mxu0 %v788
    %906 = vmatprep.subr.bf16.mxu0 %v792
    %907 = vmatpush1.bf16.msra.mxu0 %v791
    %908 = vmatprep.subr.bf16.mxu0 %v795
    %909 = vmatpush1.bf16.msra.mxu0 %v794
    %910 = vmatprep.subr.bf16.mxu0 %v798
    %911 = vmatpush1.bf16.msra.mxu0 %v797
    %912 = vmatprep.subr.bf16.mxu0 %v801
    %913 = vmatpush1.bf16.msra.mxu0 %v800
    %914 = vmatprep.subr.bf16.mxu0 %v804
    %915 = vmatpush1.bf16.msra.mxu0 %v803
    %916 = vmatprep.subr.bf16.mxu0 %v807
    %917 = vmatpush1.bf16.msra.mxu0 %v806
    %918 = vmatprep.subr.bf16.mxu0 %v810
    %919 = vmatpush1.bf16.msra.mxu0 %v809
    %920 = vmatprep.subr.bf16.mxu0 %v813
    %921 = vmatpush1.bf16.msra.mxu0 %v812
    %922 = vmatprep.mubr.bf16.mxu0 %v485
    %923 = vmatmul.mubr.bf16.gmra.mrb[0].mxu0 %v484
    %v924 = vpop.f32.mrb[0].mxu0
    %v925 = vadd.f32 0.0, %v924
    %v926 = vpop.f32.mrb[0].mxu0
    %v927 = vadd.f32 0.0, %v926
    %v928 = vpop.f32.mrb[0].mxu0
    %v929 = vpop.f32.mrb[0].mxu0
    %930 = vdwg.mxu0
    %931 = vmatprep.subr.bf16.mxu0 %v816
    %932 = vmatpush1.bf16.msra.mxu0 %v815
    %933 = vmatprep.subr.bf16.mxu0 %v819
    %934 = vmatpush1.bf16.msra.mxu0 %v818
    %935 = vmatprep.subr.bf16.mxu0 %v822
    %936 = vmatpush1.bf16.msra.mxu0 %v821
    %937 = vmatprep.subr.bf16.mxu0 %v825
    %938 = vmatpush1.bf16.msra.mxu0 %v824
    %939 = vmatprep.subr.bf16.mxu0 0
    %940 = vmatpush1.bf16.msra.mxu0 0
    %941 = vmatprep.subr.bf16.mxu0 0
    %942 = vmatpush1.bf16.msra.mxu0 0
    %943 = vmatprep.subr.bf16.mxu0 0
    %944 = vmatpush1.bf16.msra.mxu0 0
    %945 = vmatprep.subr.bf16.mxu0 0
    %946 = vmatpush1.bf16.msra.mxu0 0
    %947 = vmatprep.subr.bf16.mxu0 0
    %948 = vmatpush1.bf16.msra.mxu0 0
    %949 = vmatprep.subr.bf16.mxu0 0
    %950 = vmatpush1.bf16.msra.mxu0 0
    %951 = vmatprep.subr.bf16.mxu0 0
    %952 = vmatpush1.bf16.msra.mxu0 0
    %953 = vmatprep.subr.bf16.mxu0 0
    %954 = vmatpush1.bf16.msra.mxu0 0
    %955 = vmatprep.subr.bf16.mxu0 0
    %956 = vmatpush1.bf16.msra.mxu0 0
    %957 = vmatprep.subr.bf16.mxu0 0
    %958 = vmatpush1.bf16.msra.mxu0 0
    %959 = vmatprep.subr.bf16.mxu0 0
    %960 = vmatpush1.bf16.msra.mxu0 0
    %961 = vmatprep.subr.bf16.mxu0 0
    %962 = vmatpush1.bf16.msra.mxu0 0
    %963 = vmatprep.mubr.bf16.mxu0 0
    %964 = vmatmul.mubr.bf16.gmra.mrb[0].mxu0 %v888
    %v965 = vpop.f32.mrb[0].mxu0
    %v966 = vadd.f32 %v925, %v965
    %v967 = vpop.f32.mrb[0].mxu0
    %v968 = vadd.f32 %v927, %v967
    %v969 = vpop.f32.mrb[0].mxu0
    %v970 = vpop.f32.mrb[0].mxu0
    %971 = vdwg.mxu0
    %972 = vmatprep.subr.bf16.mxu0 0
    %973 = vmatpush1.bf16.msra.mxu0 %v769
    %974 = vmatprep.subr.bf16.mxu0 0
    %975 = vmatpush1.bf16.msra.mxu0 %v772
    %976 = vmatprep.subr.bf16.mxu0 0
    %977 = vmatpush1.bf16.msra.mxu0 %v775
    %978 = vmatprep.subr.bf16.mxu0 0
    %979 = vmatpush1.bf16.msra.mxu0 %v778
    %980 = vmatprep.subr.bf16.mxu0 0
    %981 = vmatpush1.bf16.msra.mxu0 %v781
    %982 = vmatprep.subr.bf16.mxu0 0
    %983 = vmatpush1.bf16.msra.mxu0 %v784
    %984 = vmatprep.subr.bf16.mxu0 0
    %985 = vmatpush1.bf16.msra.mxu0 %v787
    %986 = vmatprep.subr.bf16.mxu0 0
    %987 = vmatpush1.bf16.msra.mxu0 %v790
    %988 = vmatprep.subr.bf16.mxu0 0
    %989 = vmatpush1.bf16.msra.mxu0 %v793
    %990 = vmatprep.subr.bf16.mxu0 0
    %991 = vmatpush1.bf16.msra.mxu0 %v796
    %992 = vmatprep.subr.bf16.mxu0 0
    %993 = vmatpush1.bf16.msra.mxu0 %v799
    %994 = vmatprep.subr.bf16.mxu0 0
    %995 = vmatpush1.bf16.msra.mxu0 %v802
    %996 = vmatprep.subr.bf16.mxu0 0
    %997 = vmatpush1.bf16.msra.mxu0 %v805
    %998 = vmatprep.subr.bf16.mxu0 0
    %999 = vmatpush1.bf16.msra.mxu0 %v808
    %1000 = vmatprep.subr.bf16.mxu0 0
    %1001 = vmatpush1.bf16.msra.mxu0 %v811
    %1002 = vmatprep.subr.bf16.mxu0 0
    %1003 = vmatpush1.bf16.msra.mxu0 %v814
    %1004 = vmatprep.mubr.bf16.mxu0 %v485
    %1005 = vmatmul.mubr.bf16.gmra.mrb[0].mxu0 %v484
    %v1006 = vpop.f32.mrb[0].mxu0
    %v1007 = vadd.f32 0.0, %v1006
    %v1008 = vpop.f32.mrb[0].mxu0
    %v1009 = vpop.f32.mrb[0].mxu0
    %v1010 = vpop.f32.mrb[0].mxu0
    %1011 = vdwg.mxu0
    %1012 = vmatprep.subr.bf16.mxu0 0
    %1013 = vmatpush1.bf16.msra.mxu0 %v817
    %1014 = vmatprep.subr.bf16.mxu0 0
    %1015 = vmatpush1.bf16.msra.mxu0 %v820
    %1016 = vmatprep.subr.bf16.mxu0 0
    %1017 = vmatpush1.bf16.msra.mxu0 %v823
    %1018 = vmatprep.subr.bf16.mxu0 0
    %1019 = vmatpush1.bf16.msra.mxu0 %v826
    %1020 = vmatprep.subr.bf16.mxu0 0
    %1021 = vmatpush1.bf16.msra.mxu0 0
    %1022 = vmatprep.subr.bf16.mxu0 0
    %1023 = vmatpush1.bf16.msra.mxu0 0
    %1024 = vmatprep.subr.bf16.mxu0 0
    %1025 = vmatpush1.bf16.msra.mxu0 0
    %1026 = vmatprep.subr.bf16.mxu0 0
    %1027 = vmatpush1.bf16.msra.mxu0 0
    %1028 = vmatprep.subr.bf16.mxu0 0
    %1029 = vmatpush1.bf16.msra.mxu0 0
    %1030 = vmatprep.subr.bf16.mxu0 0
    %1031 = vmatpush1.bf16.msra.mxu0 0
    %1032 = vmatprep.subr.bf16.mxu0 0
    %1033 = vmatpush1.bf16.msra.mxu0 0
    %1034 = vmatprep.subr.bf16.mxu0 0
    %1035 = vmatpush1.bf16.msra.mxu0 0
    %1036 = vmatprep.subr.bf16.mxu0 0
    %1037 = vmatpush1.bf16.msra.mxu0 0
    %1038 = vmatprep.subr.bf16.mxu0 0
    %1039 = vmatpush1.bf16.msra.mxu0 0
    %1040 = vmatprep.subr.bf16.mxu0 0
    %1041 = vmatpush1.bf16.msra.mxu0 0
    %1042 = vmatprep.subr.bf16.mxu0 0
    %1043 = vmatpush1.bf16.msra.mxu0 0
    %1044 = vmatprep.mubr.bf16.mxu0 0
    %1045 = vmatmul.mubr.bf16.gmra.mrb[0].mxu0 %v888
    %v1046 = vpop.f32.mrb[0].mxu0
    %v1047 = vadd.f32 %v1007, %v1046
    %v1048 = vpop.f32.mrb[0].mxu0
    %v1049 = vpop.f32.mrb[0].mxu0
    %v1050 = vpop.f32.mrb[0].mxu0
    %1051 = vdwg.mxu0
    %v1052 = vxor.u32 %v968, 2147483648
    %v1053 = vmul.f32 %v1052, 1.442695
    %v1054 = vpow.pop %v1053
    %v1055 = vadd.f32 %v1054, 1.0
    %v1056 = vrcp.pop %v1055
    %v1057 = vmul.f32 1.0, %v1056
    %v1058 = vmul.f32 %v968, %v1057
    %v1059 = vtanh.pop %v1047
    %v1060 = vld [vmem:[%s15] sm:$0x1]
    %v1061 = vpack.c.bf16 %v1059, %v1059
    %v1062 = vld [vmem:[%s16] sm:$0xf]
    %v1063 = vld [vmem:[%s16 + $0x4] sm:$0xf]
    %v1064 = vld [vmem:[%s16 + $0x8] sm:$0xf]
    %v1065 = vld [vmem:[%s16 + $0xc] sm:$0xf]
    %v1070 = vunpack.c.l.b16 %v1062
    %v1071 = vunpack.c.l.b16 %v1063
    %v1072 = vunpack.c.l.b16 %v1064
    %v1073 = vunpack.c.l.b16 %v1065
    %v1074 = vpack.c.b16 %v1071, %v1070
    %v1075 = vpack.c.b16 %v1073, %v1072
    %vm1078 = vcmask 261120
    %v1080 = vsel %vm1078, %v1061, 0
    %1082 = vmatprep.subr.bf16.mxu0 0
    %1083 = vmatpush1.bf16.msra.mxu0 %v1074
    %1084 = vmatprep.subr.bf16.mxu0 0
    %1085 = vmatpush1.bf16.msra.mxu0 %v1075
    %1086 = vmatprep.subr.bf16.mxu0 0
    %1087 = vmatpush1.bf16.msra.mxu0 0
    %1088 = vmatprep.subr.bf16.mxu0 0
    %1089 = vmatpush1.bf16.msra.mxu0 0
    %1090 = vmatprep.subr.bf16.mxu0 0
    %1091 = vmatpush1.bf16.msra.mxu0 0
    %1092 = vmatprep.subr.bf16.mxu0 0
    %1093 = vmatpush1.bf16.msra.mxu0 0
    %1094 = vmatprep.subr.bf16.mxu0 0
    %1095 = vmatpush1.bf16.msra.mxu0 0
    %1096 = vmatprep.subr.bf16.mxu0 0
    %1097 = vmatpush1.bf16.msra.mxu0 0
    %1098 = vmatprep.subr.bf16.mxu0 0
    %1099 = vmatpush1.bf16.msra.mxu0 0
    %1100 = vmatprep.subr.bf16.mxu0 0
    %1101 = vmatpush1.bf16.msra.mxu0 0
    %1102 = vmatprep.subr.bf16.mxu0 0
    %1103 = vmatpush1.bf16.msra.mxu0 0
    %1104 = vmatprep.subr.bf16.mxu0 0
    %1105 = vmatpush1.bf16.msra.mxu0 0
    %1106 = vmatprep.subr.bf16.mxu0 0
    %1107 = vmatpush1.bf16.msra.mxu0 0
    %1108 = vmatprep.subr.bf16.mxu0 0
    %1109 = vmatpush1.bf16.msra.mxu0 0
    %1110 = vmatprep.subr.bf16.mxu0 0
    %1111 = vmatpush1.bf16.msra.mxu0 0
    %1112 = vmatprep.subr.bf16.mxu0 0
    %1113 = vmatpush1.bf16.msra.mxu0 0
    %1114 = vmatprep.mubr.bf16.mxu0 0
    %1115 = vmatmul.mubr.bf16.gmra.mrb[0].mxu0 %v1080
    %v1116 = vpop.f32.mrb[0].mxu0
    %v1117 = vadd.f32 0.0, %v1116
    %v1118 = vpop.f32.mrb[0].mxu0
    %v1119 = vpop.f32.mrb[0].mxu0
    %v1120 = vpop.f32.mrb[0].mxu0
    %1121 = vdwg.mxu0
    %v1123 = vlaneseq
    %v1124 = vshrl.u32 %v1123, 7
    %v1125 = vsub.s32 0, %v1124
    %v1126 = vrot.slane %v1060, %v1125
    %v1128 = vadd.f32 %v1126, %v1117
    %v1129 = vmul.f32 %v1128, 1.442695
    %v1130 = vpow.pop %v1129
    %v1131 = vsub.f32 0.0, %v1130
    %v1132 = vmul.f32 %v1131, 1.442695
    %v1133 = vpow.pop %v1132
    %v1135 = vrot.slane %v966, 6
    %1136 = vrot.lane.b32.xlu0 %v1135, 64
    %v1137 = vpop.permute.xlu0 %1136
    %v1140 = vrot.slane %v1133, 4
    %vm1142 = vcmask 1041408
    %v1143 = vsel %vm1142, %v966, %v1137
    %vm1144 = vcmask 1043456
    %v1145 = vsel %vm1144, %v1143, %v1140
    %v1147 = vcombine.high %v1145, %v1145
    %v1149 = vunpack.c.l.s4 1966171168
    %v1150 = vunpack.c.0.s8 %v1149
    %v1151 = vlaneseq
    %v1152 = vshrl.u32 %v1151, 7
    %v1153 = vsub.s32 %v1150, %v1152
    %v1154 = vrot.slane %v1145, %v1153
    %v1156 = vunpack.c.l.s4 1966171168
    %v1157 = vunpack.c.0.s8 %v1156
    %v1158 = vlaneseq
    %v1159 = vshrl.u32 %v1158, 7
    %v1160 = vsub.s32 %v1157, %v1159
    %v1161 = vrot.slane %v1147, %v1160
    %v1162 = vcombine.high %v1154, %v1154
    %v1163 = vcombine.high %v1161, %v1161
    %v1165 = vunpack.c.l.s4 1966171168
    %v1166 = vunpack.c.0.s8 %v1165
    %v1167 = vlaneseq
    %v1168 = vshrl.u32 %v1167, 7
    %v1169 = vsub.s32 %v1166, %v1168
    %v1170 = vrot.slane %v1154, %v1169
    %v1172 = vunpack.c.l.s4 1966171168
    %v1173 = vunpack.c.0.s8 %v1172
    %v1174 = vlaneseq
    %v1175 = vshrl.u32 %v1174, 7
    %v1176 = vsub.s32 %v1173, %v1175
    %v1177 = vrot.slane %v1161, %v1176
    %v1179 = vunpack.c.l.s4 1966171168
    %v1180 = vunpack.c.0.s8 %v1179
    %v1181 = vlaneseq
    %v1182 = vshrl.u32 %v1181, 7
    %v1183 = vsub.s32 %v1180, %v1182
    %v1184 = vrot.slane %v1162, %v1183
    %v1186 = vunpack.c.l.s4 1966171168
    %v1187 = vunpack.c.0.s8 %v1186
    %v1188 = vlaneseq
    %v1189 = vshrl.u32 %v1188, 7
    %v1190 = vsub.s32 %v1187, %v1189
    %v1191 = vrot.slane %v1163, %v1190
    %v1192 = vcombine.high %v1170, %v1170
    %v1193 = vcombine.high %v1184, %v1184
    %v1194 = vld [vmem:[%s24] sm:$0xff]
    %v1195 = vld [vmem:[%s24 + $0x8] sm:$0xff]
    %v1196 = vlaneseq
    %v1197 = vshrl.u32 %v1196, 7
    %v1198 = vsub.s32 0, %v1197
    %v1199 = vrot.slane %v1170, %v1198
    %v1200 = vlaneseq
    %v1201 = vshrl.u32 %v1200, 7
    %v1202 = vsub.s32 0, %v1201
    %v1203 = vrot.slane %v1184, %v1202
    %v1204 = vlaneseq
    %v1205 = vshrl.u32 %v1204, 7
    %v1206 = vsub.s32 0, %v1205
    %v1207 = vrot.slane %v1192, %v1206
    %v1208 = vlaneseq
    %v1209 = vshrl.u32 %v1208, 7
    %v1210 = vsub.s32 0, %v1209
    %v1211 = vrot.slane %v1193, %v1210
    %v1212 = vlaneseq
    %v1213 = vshrl.u32 %v1212, 7
    %v1214 = vsub.s32 0, %v1213
    %v1215 = vrot.slane %v1177, %v1214
    %v1216 = vlaneseq
    %v1217 = vshrl.u32 %v1216, 7
    %v1218 = vsub.s32 0, %v1217
    %v1219 = vrot.slane %v1191, %v1218
    %v1226 = vmul.f32 %v1199, %v1194
    %v1227 = vmul.f32 %v1199, %v1195
    %v1228 = vmul.f32 %v1203, %v1194
    %v1229 = vmul.f32 %v1203, %v1195
    %v1230 = vmul.f32 %v1207, %v1194
    %v1231 = vmul.f32 %v1207, %v1195
    %v1232 = vmul.f32 %v1211, %v1194
    %v1233 = vmul.f32 %v1211, %v1195
    %v1234 = vmul.f32 %v1215, %v1194
    %v1235 = vmul.f32 %v1215, %v1195
    %v1236 = vmul.f32 %v1219, %v1194
    %v1237 = vmul.f32 %v1219, %v1195
    %v1239 = vsel %vm214, %v1226, 0
    %v1242 = vsel %vm214, %v1227, 0
    %v1245 = vsel %vm214, %v1228, 0
    %v1248 = vsel %vm214, %v1229, 0
    %v1251 = vsel %vm214, %v1230, 0
    %v1254 = vsel %vm214, %v1231, 0
    %v1257 = vsel %vm214, %v1232, 0
    %v1260 = vsel %vm214, %v1233, 0
    %v1263 = vsel %vm214, %v1234, 0
    %v1266 = vsel %vm214, %v1235, 0
    %v1269 = vsel %vm214, %v1236, 0
    %v1272 = vsel %vm214, %v1237, 0
    %1274 = vmatprep.subr.mxu0 0.0
    %1275 = vmatpush1.msra.mxu0 %v91
    %1276 = vmatprep.subr.mxu0 0.0
    %1277 = vmatpush1.msra.mxu0 %v92
    %1278 = vmatprep.subr.mxu0 0.0
    %1279 = vmatpush1.msra.mxu0 %v93
    %1280 = vmatprep.subr.mxu0 0.0
    %1281 = vmatpush1.msra.mxu0 %v94
    %1282 = vmatprep.subr.mxu0 0.0
    %1283 = vmatpush1.msra.mxu0 %v95
    %1284 = vmatprep.subr.mxu0 0.0
    %1285 = vmatpush1.msra.mxu0 %v96
    %1286 = vmatprep.subr.mxu0 0.0
    %1287 = vmatpush1.msra.mxu0 %v97
    %1288 = vmatprep.subr.mxu0 0.0
    %1289 = vmatpush1.msra.mxu0 %v98
    %1290 = vmatprep.subr.mxu0 0.0
    %1291 = vmatpush1.msra.mxu0 0.0
    %1292 = vmatprep.subr.mxu0 0.0
    %1293 = vmatpush1.msra.mxu0 0.0
    %1294 = vmatprep.subr.mxu0 0.0
    %1295 = vmatpush1.msra.mxu0 0.0
    %1296 = vmatprep.subr.mxu0 0.0
    %1297 = vmatpush1.msra.mxu0 0.0
    %1298 = vmatprep.subr.mxu0 0.0
    %1299 = vmatpush1.msra.mxu0 0.0
    %1300 = vmatprep.subr.mxu0 0.0
    %1301 = vmatpush1.msra.mxu0 0.0
    %1302 = vmatprep.subr.mxu0 0.0
    %1303 = vmatpush1.msra.mxu0 0.0
    %1304 = vmatprep.subr.mxu0 0.0
    %1305 = vmatpush1.msra.mxu0 0.0
    %1306 = vmatprep.subr.mxu0 0.0
    %1307 = vmatpush1.msra.mxu0 0.0
    %1308 = vmatprep.subr.mxu0 0.0
    %1309 = vmatpush1.msra.mxu0 0.0
    %1310 = vmatprep.subr.mxu0 0.0
    %1311 = vmatpush1.msra.mxu0 0.0
    %1312 = vmatprep.subr.mxu0 0.0
    %1313 = vmatpush1.msra.mxu0 0.0
    %1314 = vmatprep.subr.mxu0 0.0
    %1315 = vmatpush1.msra.mxu0 0.0
    %1316 = vmatprep.subr.mxu0 0.0
    %1317 = vmatpush1.msra.mxu0 0.0
    %1318 = vmatprep.subr.mxu0 0.0
    %1319 = vmatpush1.msra.mxu0 0.0
    %1320 = vmatprep.subr.mxu0 0.0
    %1321 = vmatpush1.msra.mxu0 0.0
    %1322 = vmatprep.subr.mxu0 0.0
    %1323 = vmatpush1.msra.mxu0 0.0
    %1324 = vmatprep.subr.mxu0 0.0
    %1325 = vmatpush1.msra.mxu0 0.0
    %1326 = vmatprep.subr.mxu0 0.0
    %1327 = vmatpush1.msra.mxu0 0.0
    %1328 = vmatprep.subr.mxu0 0.0
    %1329 = vmatpush1.msra.mxu0 0.0
    %1330 = vmatprep.subr.mxu0 0.0
    %1331 = vmatpush1.msra.mxu0 0.0
    %1332 = vmatprep.subr.mxu0 0.0
    %1333 = vmatpush1.msra.mxu0 0.0
    %1334 = vmatprep.subr.mxu0 0.0
    %1335 = vmatpush1.msra.mxu0 0.0
    %1336 = vmatprep.subr.mxu0 0.0
    %1337 = vmatpush1.msra.mxu0 0.0
    %1338 = vmatprep.mubr.f32.mxu0 0.0
    %1339 = vmatmul.mubr.f32.gmra.mrb[0].mxu0 %v1239
    %v1340 = vpop.f32.mrb[0].mxu0
    %v1341 = vadd.f32 0.0, %v1340
    %v1342 = vpop.f32.mrb[0].mxu0
    %1343 = vmatprep.mubr.f32.mxu0 0.0
    %1344 = vmatmul.mubr.f32.gmra.mrb[0].mxu0 %v1242
    %v1345 = vpop.f32.mrb[0].mxu0
    %v1346 = vadd.f32 0.0, %v1345
    %v1347 = vpop.f32.mrb[0].mxu0
    %1348 = vmatprep.mubr.f32.mxu0 0.0
    %1349 = vmatmul.mubr.f32.gmra.mrb[0].mxu0 %v1245
    %v1350 = vpop.f32.mrb[0].mxu0
    %v1351 = vadd.f32 0.0, %v1350
    %v1352 = vpop.f32.mrb[0].mxu0
    %1353 = vmatprep.mubr.f32.mxu0 0.0
    %1354 = vmatmul.mubr.f32.gmra.mrb[0].mxu0 %v1248
    %v1355 = vpop.f32.mrb[0].mxu0
    %v1356 = vadd.f32 0.0, %v1355
    %v1357 = vpop.f32.mrb[0].mxu0
    %1358 = vmatprep.mubr.f32.mxu0 0.0
    %1359 = vmatmul.mubr.f32.gmra.mrb[0].mxu0 %v1251
    %v1360 = vpop.f32.mrb[0].mxu0
    %v1361 = vadd.f32 0.0, %v1360
    %v1362 = vpop.f32.mrb[0].mxu0
    %1363 = vmatprep.mubr.f32.mxu0 0.0
    %1364 = vmatmul.mubr.f32.gmra.mrb[0].mxu0 %v1254
    %v1365 = vpop.f32.mrb[0].mxu0
    %v1366 = vadd.f32 0.0, %v1365
    %v1367 = vpop.f32.mrb[0].mxu0
    %1368 = vmatprep.mubr.f32.mxu0 0.0
    %1369 = vmatmul.mubr.f32.gmra.mrb[0].mxu0 %v1257
    %v1370 = vpop.f32.mrb[0].mxu0
    %v1371 = vadd.f32 0.0, %v1370
    %v1372 = vpop.f32.mrb[0].mxu0
    %1373 = vmatprep.mubr.f32.mxu0 0.0
    %1374 = vmatmul.mubr.f32.gmra.mrb[0].mxu0 %v1260
    %v1375 = vpop.f32.mrb[0].mxu0
    %v1376 = vadd.f32 0.0, %v1375
    %v1377 = vpop.f32.mrb[0].mxu0
    %1378 = vmatprep.mubr.f32.mxu0 0.0
    %1379 = vmatmul.mubr.f32.gmra.mrb[0].mxu0 %v1263
    %v1380 = vpop.f32.mrb[0].mxu0
    %v1381 = vadd.f32 0.0, %v1380
    %v1382 = vpop.f32.mrb[0].mxu0
    %1383 = vmatprep.mubr.f32.mxu0 0.0
    %1384 = vmatmul.mubr.f32.gmra.mrb[0].mxu0 %v1266
    %v1385 = vpop.f32.mrb[0].mxu0
    %v1386 = vadd.f32 0.0, %v1385
    %v1387 = vpop.f32.mrb[0].mxu0
    %1388 = vmatprep.mubr.f32.mxu0 0.0
    %1389 = vmatmul.mubr.f32.gmra.mrb[0].mxu0 %v1269
    %v1390 = vpop.f32.mrb[0].mxu0
    %v1391 = vadd.f32 0.0, %v1390
    %v1392 = vpop.f32.mrb[0].mxu0
    %1393 = vmatprep.mubr.f32.mxu0 0.0
    %1394 = vmatmul.mubr.f32.gmra.mrb[0].mxu0 %v1272
    %v1395 = vpop.f32.mrb[0].mxu0
    %v1396 = vadd.f32 0.0, %v1395
    %v1397 = vpop.f32.mrb[0].mxu0
    %1398 = vdwg.mxu0
    %v1401 = vunpack.c.l.s4 1966171168
    %v1402 = vunpack.c.0.s8 %v1401
    %v1403 = vlaneseq
    %v1404 = vshrl.u32 %v1403, 7
    %v1405 = vsub.s32 %v1402, %v1404
    %v1406 = vrot.slane %v968, %v1405
    %v1407 = vcombine.high %v1406, %v1406
    %v1409 = vunpack.c.l.s4 1966171168
    %v1410 = vunpack.c.0.s8 %v1409
    %v1411 = vlaneseq
    %v1412 = vshrl.u32 %v1411, 7
    %v1413 = vsub.s32 %v1410, %v1412
    %v1414 = vrot.slane %v1406, %v1413
    %v1416 = vunpack.c.l.s4 1966171168
    %v1417 = vunpack.c.0.s8 %v1416
    %v1418 = vlaneseq
    %v1419 = vshrl.u32 %v1418, 7
    %v1420 = vsub.s32 %v1417, %v1419
    %v1421 = vrot.slane %v1407, %v1420
    %v1422 = vlaneseq
    %v1423 = vshrl.u32 %v1422, 7
    %v1424 = vsub.s32 0, %v1423
    %v1425 = vrot.slane %v1414, %v1424
    %v1426 = vlaneseq
    %v1427 = vshrl.u32 %v1426, 7
    %v1428 = vsub.s32 0, %v1427
    %v1429 = vrot.slane %v1421, %v1428
    %v1432 = vmul.f32 %v1361, %v1425
    %v1433 = vmul.f32 %v1366, %v1425
    %v1434 = vmul.f32 %v1371, %v1429
    %v1435 = vmul.f32 %v1376, %v1429
    %vm1442 = vcmask 1045504
    %v1443 = vrot.slane %v85, 2
    %v1444 = vrot.slane %v86, 2
    %v1445 = vsel %vm1442, %v1443, %v1444
    %v1446 = vrot.slane %v87, 2
    %v1447 = vsel %vm1442, %v1444, %v1446
    %v1448 = vrot.slane %v88, 2
    %v1449 = vrot.slane %v89, 2
    %v1450 = vsel %vm1442, %v1448, %v1449
    %v1451 = vrot.slane %v90, 2
    %v1452 = vsel %vm1442, %v1449, %v1451
    %v1457 = vmul.f32 %v1381, %v1445
    %v1458 = vmul.f32 %v1386, %v1447
    %v1459 = vmul.f32 %v1391, %v1450
    %v1460 = vmul.f32 %v1396, %v1452
    %v1461 = vadd.f32 %v1432, %v1457
    %v1462 = vadd.f32 %v1433, %v1458
    %v1463 = vadd.f32 %v1434, %v1459
    %v1464 = vadd.f32 %v1435, %v1460
    %1465 = vst.msk [vmem:[%s26 + $0x2] sm:$0xff] %vm214, %v1461
    %1466 = vst.msk [vmem:[%s26 + $0xa] sm:$0xff] %vm214, %v1462
    %1467 = vst.msk [vmem:[%s26 + $0x1a] sm:$0xff] %vm214, %v1463
    %1468 = vst.msk [vmem:[%s26 + $0x22] sm:$0xff] %vm214, %v1464
    %v1469 = vld [vmem:[%s17] sm:$0x1]
    %v1471 = vlaneseq
    %v1472 = vshrl.u32 %v1471, 7
    %v1473 = vsub.s32 0, %v1472
    %v1474 = vrot.slane %v1469, %v1473
    %v1476 = vmul.f32 %v966, %v1474
    %1477 = vrot.lane.b32.xlu0 %v966, 64
    %v1478 = vpop.permute.xlu0 %1477
    %v1480 = vmul.f32 %v1476, %v1478
    %v1482 = vsel %vm214, %v1480, 0
    %1484 = vmatprep.subr.mxu0 0.0
    %1485 = vmatpush1.msra.mxu0 %v91
    %1486 = vmatprep.subr.mxu0 0.0
    %1487 = vmatpush1.msra.mxu0 %v92
    %1488 = vmatprep.subr.mxu0 0.0
    %1489 = vmatpush1.msra.mxu0 %v93
    %1490 = vmatprep.subr.mxu0 0.0
    %1491 = vmatpush1.msra.mxu0 %v94
    %1492 = vmatprep.subr.mxu0 0.0
    %1493 = vmatpush1.msra.mxu0 %v95
    %1494 = vmatprep.subr.mxu0 0.0
    %1495 = vmatpush1.msra.mxu0 %v96
    %1496 = vmatprep.subr.mxu0 0.0
    %1497 = vmatpush1.msra.mxu0 %v97
    %1498 = vmatprep.subr.mxu0 0.0
    %1499 = vmatpush1.msra.mxu0 %v98
    %1500 = vmatprep.subr.mxu0 0.0
    %1501 = vmatpush1.msra.mxu0 0.0
    %1502 = vmatprep.subr.mxu0 0.0
    %1503 = vmatpush1.msra.mxu0 0.0
    %1504 = vmatprep.subr.mxu0 0.0
    %1505 = vmatpush1.msra.mxu0 0.0
    %1506 = vmatprep.subr.mxu0 0.0
    %1507 = vmatpush1.msra.mxu0 0.0
    %1508 = vmatprep.subr.mxu0 0.0
    %1509 = vmatpush1.msra.mxu0 0.0
    %1510 = vmatprep.subr.mxu0 0.0
    %1511 = vmatpush1.msra.mxu0 0.0
    %1512 = vmatprep.subr.mxu0 0.0
    %1513 = vmatpush1.msra.mxu0 0.0
    %1514 = vmatprep.subr.mxu0 0.0
    %1515 = vmatpush1.msra.mxu0 0.0
    %1516 = vmatprep.subr.mxu0 0.0
    %1517 = vmatpush1.msra.mxu0 0.0
    %1518 = vmatprep.subr.mxu0 0.0
    %1519 = vmatpush1.msra.mxu0 0.0
    %1520 = vmatprep.subr.mxu0 0.0
    %1521 = vmatpush1.msra.mxu0 0.0
    %1522 = vmatprep.subr.mxu0 0.0
    %1523 = vmatpush1.msra.mxu0 0.0
    %1524 = vmatprep.subr.mxu0 0.0
    %1525 = vmatpush1.msra.mxu0 0.0
    %1526 = vmatprep.subr.mxu0 0.0
    %1527 = vmatpush1.msra.mxu0 0.0
    %1528 = vmatprep.subr.mxu0 0.0
    %1529 = vmatpush1.msra.mxu0 0.0
    %1530 = vmatprep.subr.mxu0 0.0
    %1531 = vmatpush1.msra.mxu0 0.0
    %1532 = vmatprep.subr.mxu0 0.0
    %1533 = vmatpush1.msra.mxu0 0.0
    %1534 = vmatprep.subr.mxu0 0.0
    %1535 = vmatpush1.msra.mxu0 0.0
    %1536 = vmatprep.subr.mxu0 0.0
    %1537 = vmatpush1.msra.mxu0 0.0
    %1538 = vmatprep.subr.mxu0 0.0
    %1539 = vmatpush1.msra.mxu0 0.0
    %1540 = vmatprep.subr.mxu0 0.0
    %1541 = vmatpush1.msra.mxu0 0.0
    %1542 = vmatprep.subr.mxu0 0.0
    %1543 = vmatpush1.msra.mxu0 0.0
    %1544 = vmatprep.subr.mxu0 0.0
    %1545 = vmatpush1.msra.mxu0 0.0
    %1546 = vmatprep.subr.mxu0 0.0
    %1547 = vmatpush1.msra.mxu0 0.0
    %1548 = vmatprep.mubr.f32.mxu0 0.0
    %1549 = vmatmul.mubr.f32.gmra.mrb[0].mxu0 %v1482
    %v1550 = vpop.f32.mrb[0].mxu0
    %v1551 = vadd.f32 0.0, %v1550
    %v1552 = vpop.f32.mrb[0].mxu0
    %1553 = vdwg.mxu0
    %v1554 = vmul.f32 %v1341, %v1445
    %v1555 = vmul.f32 %v1346, %v1447
    %v1556 = vmul.f32 %v1351, %v1450
    %v1557 = vmul.f32 %v1356, %v1452
    %v1558 = vsel %vm214, %v1554, 0.0
    %v1559 = vsel %vm214, %v1555, 0.0
    %v1560 = vadd.f32 %v1558, %v1559
    %v1561 = vrot.slane %v1560, 4
    %v1562 = vadd.f32 %v1560, %v1561
    %v1563 = vrot.slane %v1562, 2
    %v1564 = vadd.f32 %v1562, %v1563
    %v1565 = vrot.slane %v1564, 1
    %v1566 = vadd.f32 %v1564, %v1565
    %v1567 = vsel %vm214, %v1556, 0.0
    %v1568 = vsel %vm214, %v1557, 0.0
    %v1569 = vadd.f32 %v1567, %v1568
    %v1570 = vrot.slane %v1569, 4
    %v1571 = vadd.f32 %v1569, %v1570
    %v1572 = vrot.slane %v1571, 2
    %v1573 = vadd.f32 %v1571, %v1572
    %v1574 = vrot.slane %v1573, 1
    %v1575 = vadd.f32 %v1573, %v1574
    %v1576 = vmul.f32 %v1551, %v968
    %v1579 = vsel %vm177, %v1575, %v1566
    %v1581 = vadd.f32 %v1576, %v1579
    %v1583 = vsel %vm214, %v1581, 0
    %1585 = vmatprep.subr.mxu0 0.0
    %1586 = vmatpush1.msra.mxu0 %v91
    %1587 = vmatprep.subr.mxu0 0.0
    %1588 = vmatpush1.msra.mxu0 %v92
    %1589 = vmatprep.subr.mxu0 0.0
    %1590 = vmatpush1.msra.mxu0 %v93
    %1591 = vmatprep.subr.mxu0 0.0
    %1592 = vmatpush1.msra.mxu0 %v94
    %1593 = vmatprep.subr.mxu0 0.0
    %1594 = vmatpush1.msra.mxu0 %v95
    %1595 = vmatprep.subr.mxu0 0.0
    %1596 = vmatpush1.msra.mxu0 %v96
    %1597 = vmatprep.subr.mxu0 0.0
    %1598 = vmatpush1.msra.mxu0 %v97
    %1599 = vmatprep.subr.mxu0 0.0
    %1600 = vmatpush1.msra.mxu0 %v98
    %1601 = vmatprep.subr.mxu0 0.0
    %1602 = vmatpush1.msra.mxu0 0.0
    %1603 = vmatprep.subr.mxu0 0.0
    %1604 = vmatpush1.msra.mxu0 0.0
    %1605 = vmatprep.subr.mxu0 0.0
    %1606 = vmatpush1.msra.mxu0 0.0
    %1607 = vmatprep.subr.mxu0 0.0
    %1608 = vmatpush1.msra.mxu0 0.0
    %1609 = vmatprep.subr.mxu0 0.0
    %1610 = vmatpush1.msra.mxu0 0.0
    %1611 = vmatprep.subr.mxu0 0.0
    %1612 = vmatpush1.msra.mxu0 0.0
    %1613 = vmatprep.subr.mxu0 0.0
    %1614 = vmatpush1.msra.mxu0 0.0
    %1615 = vmatprep.subr.mxu0 0.0
    %1616 = vmatpush1.msra.mxu0 0.0
    %1617 = vmatprep.subr.mxu0 0.0
    %1618 = vmatpush1.msra.mxu0 0.0
    %1619 = vmatprep.subr.mxu0 0.0
    %1620 = vmatpush1.msra.mxu0 0.0
    %1621 = vmatprep.subr.mxu0 0.0
    %1622 = vmatpush1.msra.mxu0 0.0
    %1623 = vmatprep.subr.mxu0 0.0
    %1624 = vmatpush1.msra.mxu0 0.0
    %1625 = vmatprep.subr.mxu0 0.0
    %1626 = vmatpush1.msra.mxu0 0.0
    %1627 = vmatprep.subr.mxu0 0.0
    %1628 = vmatpush1.msra.mxu0 0.0
    %1629 = vmatprep.subr.mxu0 0.0
    %1630 = vmatpush1.msra.mxu0 0.0
    %1631 = vmatprep.subr.mxu0 0.0
    %1632 = vmatpush1.msra.mxu0 0.0
    %1633 = vmatprep.subr.mxu0 0.0
    %1634 = vmatpush1.msra.mxu0 0.0
    %1635 = vmatprep.subr.mxu0 0.0
    %1636 = vmatpush1.msra.mxu0 0.0
    %1637 = vmatprep.subr.mxu0 0.0
    %1638 = vmatpush1.msra.mxu0 0.0
    %1639 = vmatprep.subr.mxu0 0.0
    %1640 = vmatpush1.msra.mxu0 0.0
    %1641 = vmatprep.subr.mxu0 0.0
    %1642 = vmatpush1.msra.mxu0 0.0
    %1643 = vmatprep.subr.mxu0 0.0
    %1644 = vmatpush1.msra.mxu0 0.0
    %1645 = vmatprep.subr.mxu0 0.0
    %1646 = vmatpush1.msra.mxu0 0.0
    %1647 = vmatprep.subr.mxu0 0.0
    %1648 = vmatpush1.msra.mxu0 0.0
    %1649 = vmatprep.mubr.f32.mxu0 0.0
    %1650 = vmatmul.mubr.f32.gmra.mrb[0].mxu0 %v1583
    %v1651 = vpop.f32.mrb[0].mxu0
    %v1652 = vadd.f32 0.0, %v1651
    %v1653 = vpop.f32.mrb[0].mxu0
    %1654 = vdwg.mxu0
    %v1655 = vmul.f32 %v1652, 0.0625
    %v1656 = vsub.f32 %v1581, %v1655
    %v1657 = vmul.f32 %v1656, %v1656
    %v1659 = vsel %vm214, %v1657, 0
    %1661 = vmatprep.subr.mxu0 0.0
    %1662 = vmatpush1.msra.mxu0 %v91
    %1663 = vmatprep.subr.mxu0 0.0
    %1664 = vmatpush1.msra.mxu0 %v92
    %1665 = vmatprep.subr.mxu0 0.0
    %1666 = vmatpush1.msra.mxu0 %v93
    %1667 = vmatprep.subr.mxu0 0.0
    %1668 = vmatpush1.msra.mxu0 %v94
    %1669 = vmatprep.subr.mxu0 0.0
    %1670 = vmatpush1.msra.mxu0 %v95
    %1671 = vmatprep.subr.mxu0 0.0
    %1672 = vmatpush1.msra.mxu0 %v96
    %1673 = vmatprep.subr.mxu0 0.0
    %1674 = vmatpush1.msra.mxu0 %v97
    %1675 = vmatprep.subr.mxu0 0.0
    %1676 = vmatpush1.msra.mxu0 %v98
    %1677 = vmatprep.subr.mxu0 0.0
    %1678 = vmatpush1.msra.mxu0 0.0
    %1679 = vmatprep.subr.mxu0 0.0
    %1680 = vmatpush1.msra.mxu0 0.0
    %1681 = vmatprep.subr.mxu0 0.0
    %1682 = vmatpush1.msra.mxu0 0.0
    %1683 = vmatprep.subr.mxu0 0.0
    %1684 = vmatpush1.msra.mxu0 0.0
    %1685 = vmatprep.subr.mxu0 0.0
    %1686 = vmatpush1.msra.mxu0 0.0
    %1687 = vmatprep.subr.mxu0 0.0
    %1688 = vmatpush1.msra.mxu0 0.0
    %1689 = vmatprep.subr.mxu0 0.0
    %1690 = vmatpush1.msra.mxu0 0.0
    %1691 = vmatprep.subr.mxu0 0.0
    %1692 = vmatpush1.msra.mxu0 0.0
    %1693 = vmatprep.subr.mxu0 0.0
    %1694 = vmatpush1.msra.mxu0 0.0
    %1695 = vmatprep.subr.mxu0 0.0
    %1696 = vmatpush1.msra.mxu0 0.0
    %1697 = vmatprep.subr.mxu0 0.0
    %1698 = vmatpush1.msra.mxu0 0.0
    %1699 = vmatprep.subr.mxu0 0.0
    %1700 = vmatpush1.msra.mxu0 0.0
    %1701 = vmatprep.subr.mxu0 0.0
    %1702 = vmatpush1.msra.mxu0 0.0
    %1703 = vmatprep.subr.mxu0 0.0
    %1704 = vmatpush1.msra.mxu0 0.0
    %1705 = vmatprep.subr.mxu0 0.0
    %1706 = vmatpush1.msra.mxu0 0.0
    %1707 = vmatprep.subr.mxu0 0.0
    %1708 = vmatpush1.msra.mxu0 0.0
    %1709 = vmatprep.subr.mxu0 0.0
    %1710 = vmatpush1.msra.mxu0 0.0
    %1711 = vmatprep.subr.mxu0 0.0
    %1712 = vmatpush1.msra.mxu0 0.0
    %1713 = vmatprep.subr.mxu0 0.0
    %1714 = vmatpush1.msra.mxu0 0.0
    %1715 = vmatprep.subr.mxu0 0.0
    %1716 = vmatpush1.msra.mxu0 0.0
    %1717 = vmatprep.subr.mxu0 0.0
    %1718 = vmatpush1.msra.mxu0 0.0
    %1719 = vmatprep.subr.mxu0 0.0
    %1720 = vmatpush1.msra.mxu0 0.0
    %1721 = vmatprep.subr.mxu0 0.0
    %1722 = vmatpush1.msra.mxu0 0.0
    %1723 = vmatprep.subr.mxu0 0.0
    %1724 = vmatpush1.msra.mxu0 0.0
    %1725 = vmatprep.mubr.f32.mxu0 0.0
    %1726 = vmatmul.mubr.f32.gmra.mrb[0].mxu0 %v1659
    %v1727 = vpop.f32.mrb[0].mxu0
    %v1728 = vadd.f32 0.0, %v1727
    %v1729 = vpop.f32.mrb[0].mxu0
    %1730 = vdwg.mxu0
    %v1731 = vmul.f32 %v1728, 0.0625
    %v1732 = vadd.f32 %v1731, 0.00064
    %v1733 = vrsqrt.pop %v1732
    %v1734 = vmul.f32 %v1656, %v1733
    %v1735 = vld [vmem:[%s8] sm:$0x1]
    %v1737 = vlaneseq
    %v1738 = vshrl.u32 %v1737, 7
    %v1739 = vsub.s32 0, %v1738
    %v1740 = vrot.slane %v1735, %v1739
    %v1742 = vmul.f32 %v1734, %v1740
    %v1743 = vld [vmem:[%s9] sm:$0x1]
    %v1745 = vlaneseq
    %v1746 = vshrl.u32 %v1745, 7
    %v1747 = vsub.s32 0, %v1746
    %v1748 = vrot.slane %v1743, %v1747
    %v1750 = vadd.f32 %v1742, %v1748
    %1752 = vrot.lane.b32.xlu0 %v1058, 64
    %v1753 = vpop.permute.xlu0 %1752
    %v1755 = vmul.f32 %v1750, %v1753
    %v1756 = vpack.c.bf16 %v1755, %v1755
    %v1757 = vld [vmem:[%s18] sm:$0xf]
    %v1758 = vld [vmem:[%s18 + $0x4] sm:$0xf]
    %v1759 = vld [vmem:[%s18 + $0x8] sm:$0xf]
    %v1760 = vld [vmem:[%s18 + $0xc] sm:$0xf]
    %v1761 = vld [vmem:[%s18 + $0x10] sm:$0xf]
    %v1762 = vld [vmem:[%s18 + $0x14] sm:$0xf]
    %v1763 = vld [vmem:[%s18 + $0x18] sm:$0xf]
    %v1764 = vld [vmem:[%s18 + $0x1c] sm:$0xf]
    %v1773 = vunpack.c.l.b16 %v1757
    %v1774 = vunpack.c.l.b16 %v1758
    %v1775 = vunpack.c.l.b16 %v1759
    %v1776 = vunpack.c.l.b16 %v1760
    %v1777 = vunpack.c.l.b16 %v1761
    %v1778 = vunpack.c.l.b16 %v1762
    %v1779 = vunpack.c.l.b16 %v1763
    %v1780 = vunpack.c.l.b16 %v1764
    %v1781 = vpack.c.b16 %v1774, %v1773
    %v1782 = vpack.c.b16 %v1776, %v1775
    %v1783 = vpack.c.b16 %v1778, %v1777
    %v1784 = vpack.c.b16 %v1780, %v1779
    %v1790 = vsel %vm214, %v1756, 0
    %1792 = vmatprep.subr.bf16.mxu0 0
    %1793 = vmatpush1.bf16.msra.mxu0 %v1781
    %1794 = vmatprep.subr.bf16.mxu0 0
    %1795 = vmatpush1.bf16.msra.mxu0 %v1782
    %1796 = vmatprep.subr.bf16.mxu0 0
    %1797 = vmatpush1.bf16.msra.mxu0 %v1783
    %1798 = vmatprep.subr.bf16.mxu0 0
    %1799 = vmatpush1.bf16.msra.mxu0 %v1784
    %1800 = vmatprep.subr.bf16.mxu0 0
    %1801 = vmatpush1.bf16.msra.mxu0 0
    %1802 = vmatprep.subr.bf16.mxu0 0
    %1803 = vmatpush1.bf16.msra.mxu0 0
    %1804 = vmatprep.subr.bf16.mxu0 0
    %1805 = vmatpush1.bf16.msra.mxu0 0
    %1806 = vmatprep.subr.bf16.mxu0 0
    %1807 = vmatpush1.bf16.msra.mxu0 0
    %1808 = vmatprep.subr.bf16.mxu0 0
    %1809 = vmatpush1.bf16.msra.mxu0 0
    %1810 = vmatprep.subr.bf16.mxu0 0
    %1811 = vmatpush1.bf16.msra.mxu0 0
    %1812 = vmatprep.subr.bf16.mxu0 0
    %1813 = vmatpush1.bf16.msra.mxu0 0
    %1814 = vmatprep.subr.bf16.mxu0 0
    %1815 = vmatpush1.bf16.msra.mxu0 0
    %1816 = vmatprep.subr.bf16.mxu0 0
    %1817 = vmatpush1.bf16.msra.mxu0 0
    %1818 = vmatprep.subr.bf16.mxu0 0
    %1819 = vmatpush1.bf16.msra.mxu0 0
    %1820 = vmatprep.subr.bf16.mxu0 0
    %1821 = vmatpush1.bf16.msra.mxu0 0
    %1822 = vmatprep.subr.bf16.mxu0 0
    %1823 = vmatpush1.bf16.msra.mxu0 0
    %1824 = vmatprep.mubr.bf16.mxu0 0
    %1825 = vmatmul.mubr.bf16.gmra.mrb[0].mxu0 %v1790
    %v1826 = vpop.f32.mrb[0].mxu0
    %v1827 = vadd.f32 0.0, %v1826
    %v1828 = vpop.f32.mrb[0].mxu0
    %v1829 = vpop.f32.mrb[0].mxu0
    %v1830 = vpop.f32.mrb[0].mxu0
    %1831 = vdwg.mxu0
    %v1832 = vadd.f32 %v129, %v1827
    %v1833 = vld [vmem:[%s6] sm:$0x1]
    %v1834 = vld [vmem:[%s7] sm:$0x1]
    %v1835 = vsel %vm101, %v1832, 0.0
    %1836 = vadd.xlane.f32.xlu0 %v1835
    %v1837 = vpop.xlane.xlu0 %1836
    %v1838 = vmul.f32 %v1837, %v105
    %v1839 = vsub.f32 %v1832, %v1838
    %v1840 = vmul.f32 %v1839, %v1839
    %v1841 = vsel %vm101, %v1840, 0.0
    %1842 = vadd.xlane.f32.xlu0 %v1841
    %v1843 = vpop.xlane.xlu0 %1842
    %v1844 = vmul.f32 %v1843, %v105
    %v1845 = vadd.f32 %v1844, 1e-05
    %v1846 = vrsqrt.pop %v1845
    %v1847 = vmul.f32 %v1839, %v1846
    %v1849 = vlaneseq
    %v1850 = vshrl.u32 %v1849, 7
    %v1851 = vsub.s32 0, %v1850
    %v1852 = vrot.slane %v1833, %v1851
    %v1854 = vmul.f32 %v1847, %v1852
    %v1856 = vlaneseq
    %v1857 = vshrl.u32 %v1856, 7
    %v1858 = vsub.s32 0, %v1857
    %v1859 = vrot.slane %v1834, %v1858
    %v1861 = vadd.f32 %v1854, %v1859
    %v1863 = vrot.slane %v1861, 7
    %v1866 = vsub.f32 %v85, %v1863
    %v1867 = vsub.f32 %v88, %v1861
    %v1868 = vld [vmem:[%s19] sm:$0x1]
    %v1870 = vlaneseq
    %v1871 = vshrl.u32 %v1870, 7
    %v1872 = vsub.s32 0, %v1871
    %v1873 = vrot.slane %v1868, %v1872
    %v1875 = vmul.f32 %v1866, %v1873
    %v1876 = vmul.f32 %v1867, %v1873
    %v1879 = vrot.slane %v1875, 1
    %v1880 = vsel %vm177, %v1876, %v1879
    %v1882 = vadd.f32 %v1861, %v1880
    %v1883 = vld [vmem:[%s20] sm:$0x1]
    %v1885 = vlaneseq
    %v1886 = vshrl.u32 %v1885, 7
    %v1887 = vsub.s32 0, %v1886
    %v1888 = vrot.slane %v1883, %v1887
    %v1890 = vmul.f32 %v1866, %v1888
    %v1891 = vmul.f32 %v1867, %v1888
    %v1894 = vrot.slane %v1890, 1
    %v1895 = vsel %vm177, %v1891, %v1894
    %v1897 = vadd.f32 %v1861, %v1895
    %1899 = vrot.lane.b32.xlu0 %v1897, 64
    %v1900 = vpop.permute.xlu0 %1899
    %v1902 = vsel %vm214, %v1882, %v1900
    %v1903 = vpack.c.bf16 %v1902, %v1902
    %v1904 = vld [vmem:[%s21] sm:$0xff]
    %v1905 = vld [vmem:[%s21 + $0x8] sm:$0xff]
    %v1906 = vld [vmem:[%s21 + $0x10] sm:$0xff]
    %v1907 = vld [vmem:[%s21 + $0x18] sm:$0xff]
    %v1908 = vld [vmem:[%s21 + $0x20] sm:$0xff]
    %v1909 = vld [vmem:[%s21 + $0x28] sm:$0xff]
    %v1910 = vld [vmem:[%s21 + $0x30] sm:$0xff]
    %v1911 = vld [vmem:[%s21 + $0x38] sm:$0xff]
    %v1912 = vld [vmem:[%s21 + $0x40] sm:$0xff]
    %v1913 = vld [vmem:[%s21 + $0x48] sm:$0xff]
    %v1914 = vld [vmem:[%s21 + $0x50] sm:$0xff]
    %v1915 = vld [vmem:[%s21 + $0x58] sm:$0xff]
    %v1916 = vld [vmem:[%s21 + $0x60] sm:$0xff]
    %v1917 = vld [vmem:[%s21 + $0x68] sm:$0xff]
    %v1918 = vld [vmem:[%s21 + $0x70] sm:$0xff]
    %v1919 = vld [vmem:[%s21 + $0x78] sm:$0xff]
    %v1936 = vunpack.c.l.b16 %v1904
    %v1937 = vunpack.c.h.b16 %v1904
    %v1938 = vunpack.c.l.b16 %v1905
    %v1939 = vunpack.c.h.b16 %v1905
    %v1940 = vunpack.c.l.b16 %v1906
    %v1941 = vunpack.c.h.b16 %v1906
    %v1942 = vunpack.c.l.b16 %v1907
    %v1943 = vunpack.c.h.b16 %v1907
    %v1944 = vunpack.c.l.b16 %v1908
    %v1945 = vunpack.c.h.b16 %v1908
    %v1946 = vunpack.c.l.b16 %v1909
    %v1947 = vunpack.c.h.b16 %v1909
    %v1948 = vunpack.c.l.b16 %v1910
    %v1949 = vunpack.c.h.b16 %v1910
    %v1950 = vunpack.c.l.b16 %v1911
    %v1951 = vunpack.c.h.b16 %v1911
    %v1952 = vunpack.c.l.b16 %v1912
    %v1953 = vunpack.c.h.b16 %v1912
    %v1954 = vunpack.c.l.b16 %v1913
    %v1955 = vunpack.c.h.b16 %v1913
    %v1956 = vunpack.c.l.b16 %v1914
    %v1957 = vunpack.c.h.b16 %v1914
    %v1958 = vunpack.c.l.b16 %v1915
    %v1959 = vunpack.c.h.b16 %v1915
    %v1960 = vunpack.c.l.b16 %v1916
    %v1961 = vunpack.c.h.b16 %v1916
    %v1962 = vunpack.c.l.b16 %v1917
    %v1963 = vunpack.c.h.b16 %v1917
    %v1964 = vunpack.c.l.b16 %v1918
    %v1965 = vunpack.c.h.b16 %v1918
    %v1966 = vunpack.c.l.b16 %v1919
    %v1967 = vunpack.c.h.b16 %v1919
    %v1968 = vpack.c.b16 %v1938, %v1936
    %v1969 = vpack.c.b16 %v1939, %v1937
    %v1970 = vpack.c.b16 %v1942, %v1940
    %v1971 = vpack.c.b16 %v1943, %v1941
    %v1972 = vpack.c.b16 %v1946, %v1944
    %v1973 = vpack.c.b16 %v1947, %v1945
    %v1974 = vpack.c.b16 %v1950, %v1948
    %v1975 = vpack.c.b16 %v1951, %v1949
    %v1976 = vpack.c.b16 %v1954, %v1952
    %v1977 = vpack.c.b16 %v1955, %v1953
    %v1978 = vpack.c.b16 %v1958, %v1956
    %v1979 = vpack.c.b16 %v1959, %v1957
    %v1980 = vpack.c.b16 %v1962, %v1960
    %v1981 = vpack.c.b16 %v1963, %v1961
    %v1982 = vpack.c.b16 %v1966, %v1964
    %v1983 = vpack.c.b16 %v1967, %v1965
    %2000 = vmatprep.subr.bf16.mxu0 %v1969
    %2001 = vmatpush1.bf16.msra.mxu0 %v1968
    %2002 = vmatprep.subr.bf16.mxu0 %v1971
    %2003 = vmatpush1.bf16.msra.mxu0 %v1970
    %2004 = vmatprep.subr.bf16.mxu0 %v1973
    %2005 = vmatpush1.bf16.msra.mxu0 %v1972
    %2006 = vmatprep.subr.bf16.mxu0 %v1975
    %2007 = vmatpush1.bf16.msra.mxu0 %v1974
    %2008 = vmatprep.subr.bf16.mxu0 %v1977
    %2009 = vmatpush1.bf16.msra.mxu0 %v1976
    %2010 = vmatprep.subr.bf16.mxu0 %v1979
    %2011 = vmatpush1.bf16.msra.mxu0 %v1978
    %2012 = vmatprep.subr.bf16.mxu0 %v1981
    %2013 = vmatpush1.bf16.msra.mxu0 %v1980
    %2014 = vmatprep.subr.bf16.mxu0 %v1983
    %2015 = vmatpush1.bf16.msra.mxu0 %v1982
    %2016 = vmatprep.subr.bf16.mxu0 0
    %2017 = vmatpush1.bf16.msra.mxu0 0
    %2018 = vmatprep.subr.bf16.mxu0 0
    %2019 = vmatpush1.bf16.msra.mxu0 0
    %2020 = vmatprep.subr.bf16.mxu0 0
    %2021 = vmatpush1.bf16.msra.mxu0 0
    %2022 = vmatprep.subr.bf16.mxu0 0
    %2023 = vmatpush1.bf16.msra.mxu0 0
    %2024 = vmatprep.subr.bf16.mxu0 0
    %2025 = vmatpush1.bf16.msra.mxu0 0
    %2026 = vmatprep.subr.bf16.mxu0 0
    %2027 = vmatpush1.bf16.msra.mxu0 0
    %2028 = vmatprep.subr.bf16.mxu0 0
    %2029 = vmatpush1.bf16.msra.mxu0 0
    %2030 = vmatprep.subr.bf16.mxu0 0
    %2031 = vmatpush1.bf16.msra.mxu0 0
    %2032 = vmatprep.mubr.bf16.mxu0 0
    %2033 = vmatmul.mubr.bf16.gmra.mrb[0].mxu0 %v1903
    %v2034 = vpop.f32.mrb[0].mxu0
    %v2035 = vadd.f32 0.0, %v2034
    %v2036 = vpop.f32.mrb[0].mxu0
    %v2037 = vadd.f32 0.0, %v2036
    %v2038 = vpop.f32.mrb[0].mxu0
    %v2039 = vpop.f32.mrb[0].mxu0
    %2040 = vdwg.mxu0
    %v2041 = vmax.f32 %v2035, 0.0
    %v2042 = vmul.f32 %v2041, %v2041
    %v2043 = vxor.u32 %v2037, 2147483648
    %v2044 = vmul.f32 %v2043, 1.442695
    %v2045 = vpow.pop %v2044
    %v2046 = vadd.f32 %v2045, 1.0
    %v2047 = vrcp.pop %v2046
    %v2048 = vmul.f32 1.0, %v2047
    %v2049 = vpack.c.bf16 %v2042, %v2042
    %v2050 = vld [vmem:[%s22] sm:$0xf]
    %v2051 = vld [vmem:[%s22 + $0x4] sm:$0xf]
    %v2052 = vld [vmem:[%s22 + $0x8] sm:$0xf]
    %v2053 = vld [vmem:[%s22 + $0xc] sm:$0xf]
    %v2054 = vld [vmem:[%s22 + $0x10] sm:$0xf]
    %v2055 = vld [vmem:[%s22 + $0x14] sm:$0xf]
    %v2056 = vld [vmem:[%s22 + $0x18] sm:$0xf]
    %v2057 = vld [vmem:[%s22 + $0x1c] sm:$0xf]
    %v2058 = vld [vmem:[%s22 + $0x20] sm:$0xf]
    %v2059 = vld [vmem:[%s22 + $0x24] sm:$0xf]
    %v2060 = vld [vmem:[%s22 + $0x28] sm:$0xf]
    %v2061 = vld [vmem:[%s22 + $0x2c] sm:$0xf]
    %v2062 = vld [vmem:[%s22 + $0x30] sm:$0xf]
    %v2063 = vld [vmem:[%s22 + $0x34] sm:$0xf]
    %v2064 = vld [vmem:[%s22 + $0x38] sm:$0xf]
    %v2065 = vld [vmem:[%s22 + $0x3c] sm:$0xf]
    %v2082 = vunpack.c.l.b16 %v2050
    %v2083 = vunpack.c.l.b16 %v2051
    %v2084 = vunpack.c.l.b16 %v2052
    %v2085 = vunpack.c.l.b16 %v2053
    %v2086 = vunpack.c.l.b16 %v2054
    %v2087 = vunpack.c.l.b16 %v2055
    %v2088 = vunpack.c.l.b16 %v2056
    %v2089 = vunpack.c.l.b16 %v2057
    %v2090 = vunpack.c.l.b16 %v2058
    %v2091 = vunpack.c.l.b16 %v2059
    %v2092 = vunpack.c.l.b16 %v2060
    %v2093 = vunpack.c.l.b16 %v2061
    %v2094 = vunpack.c.l.b16 %v2062
    %v2095 = vunpack.c.l.b16 %v2063
    %v2096 = vunpack.c.l.b16 %v2064
    %v2097 = vunpack.c.l.b16 %v2065
    %v2098 = vpack.c.b16 %v2083, %v2082
    %v2099 = vpack.c.b16 %v2085, %v2084
    %v2100 = vpack.c.b16 %v2087, %v2086
    %v2101 = vpack.c.b16 %v2089, %v2088
    %v2102 = vpack.c.b16 %v2091, %v2090
    %v2103 = vpack.c.b16 %v2093, %v2092
    %v2104 = vpack.c.b16 %v2095, %v2094
    %v2105 = vpack.c.b16 %v2097, %v2096
    %2114 = vmatprep.subr.bf16.mxu0 0
    %2115 = vmatpush1.bf16.msra.mxu0 %v2098
    %2116 = vmatprep.subr.bf16.mxu0 0
    %2117 = vmatpush1.bf16.msra.mxu0 %v2099
    %2118 = vmatprep.subr.bf16.mxu0 0
    %2119 = vmatpush1.bf16.msra.mxu0 %v2100
    %2120 = vmatprep.subr.bf16.mxu0 0
    %2121 = vmatpush1.bf16.msra.mxu0 %v2101
    %2122 = vmatprep.subr.bf16.mxu0 0
    %2123 = vmatpush1.bf16.msra.mxu0 %v2102
    %2124 = vmatprep.subr.bf16.mxu0 0
    %2125 = vmatpush1.bf16.msra.mxu0 %v2103
    %2126 = vmatprep.subr.bf16.mxu0 0
    %2127 = vmatpush1.bf16.msra.mxu0 %v2104
    %2128 = vmatprep.subr.bf16.mxu0 0
    %2129 = vmatpush1.bf16.msra.mxu0 %v2105
    %2130 = vmatprep.subr.bf16.mxu0 0
    %2131 = vmatpush1.bf16.msra.mxu0 0
    %2132 = vmatprep.subr.bf16.mxu0 0
    %2133 = vmatpush1.bf16.msra.mxu0 0
    %2134 = vmatprep.subr.bf16.mxu0 0
    %2135 = vmatpush1.bf16.msra.mxu0 0
    %2136 = vmatprep.subr.bf16.mxu0 0
    %2137 = vmatpush1.bf16.msra.mxu0 0
    %2138 = vmatprep.subr.bf16.mxu0 0
    %2139 = vmatpush1.bf16.msra.mxu0 0
    %2140 = vmatprep.subr.bf16.mxu0 0
    %2141 = vmatpush1.bf16.msra.mxu0 0
    %2142 = vmatprep.subr.bf16.mxu0 0
    %2143 = vmatpush1.bf16.msra.mxu0 0
    %2144 = vmatprep.subr.bf16.mxu0 0
    %2145 = vmatpush1.bf16.msra.mxu0 0
    %2146 = vmatprep.mubr.bf16.mxu0 0
    %2147 = vmatmul.mubr.bf16.gmra.mrb[0].mxu0 %v2049
    %v2148 = vpop.f32.mrb[0].mxu0
    %v2149 = vadd.f32 0.0, %v2148
    %v2150 = vpop.f32.mrb[0].mxu0
    %v2151 = vpop.f32.mrb[0].mxu0
    %v2152 = vpop.f32.mrb[0].mxu0
    %2153 = vdwg.mxu0
    %v2154 = vmul.f32 %v2048, %v2149
    %v2155 = vadd.f32 %v1832, %v2154
    %2156 = vst.msk [vmem:[#allocation2] sm:$0x3] %vm101, %v2155
    %v2158 = vunpack.c.l.s4 1966171168
    %v2159 = vunpack.c.0.s8 %v2158
    %v2160 = vlaneseq
    %v2161 = vshrl.u32 %v2160, 7
    %v2162 = vsub.s32 %v2159, %v2161
    %v2163 = vrot.slane %v158, %v2162
    %v2164 = vcombine.high %v2163, %v2163
    %v2166 = vunpack.c.l.s4 1966171168
    %v2167 = vunpack.c.0.s8 %v2166
    %v2168 = vlaneseq
    %v2169 = vshrl.u32 %v2168, 7
    %v2170 = vsub.s32 %v2167, %v2169
    %v2171 = vrot.slane %v2163, %v2170
    %v2173 = vunpack.c.l.s4 1966171168
    %v2174 = vunpack.c.0.s8 %v2173
    %v2175 = vlaneseq
    %v2176 = vshrl.u32 %v2175, 7
    %v2177 = vsub.s32 %v2174, %v2176
    %v2178 = vrot.slane %v2164, %v2177
    %vm2181 = vcmask 516096
    %2182 = vst.msk [vmem:[%s26] sm:$0x1] %vm2181, %v2171
    %2183 = vst.msk [vmem:[%s26 + $0x18] sm:$0x1] %vm2181, %v2178
    %v2185 = vunpack.c.l.s4 1966171168
    %v2186 = vunpack.c.0.s8 %v2185
    %v2187 = vlaneseq
    %v2188 = vshrl.u32 %v2187, 7
    %v2189 = vsub.s32 %v2186, %v2188
    %v2190 = vrot.slane %v1861, %v2189
    %v2191 = vcombine.high %v2190, %v2190
    %v2193 = vunpack.c.l.s4 1966171168
    %v2194 = vunpack.c.0.s8 %v2193
    %v2195 = vlaneseq
    %v2196 = vshrl.u32 %v2195, 7
    %v2197 = vsub.s32 %v2194, %v2196
    %v2198 = vrot.slane %v2190, %v2197
    %v2200 = vunpack.c.l.s4 1966171168
    %v2201 = vunpack.c.0.s8 %v2200
    %v2202 = vlaneseq
    %v2203 = vshrl.u32 %v2202, 7
    %v2204 = vsub.s32 %v2201, %v2203
    %v2205 = vrot.slane %v2191, %v2204
    %2208 = vst.msk [vmem:[%s26 + $0x1] sm:$0x1] %vm2181, %v2198
    %2209 = vst.msk [vmem:[%s26 + $0x19] sm:$0x1] %vm2181, %v2205
    // Predicated region
    $region102: #{block_forward.1} parent=1 // pred_check
      _
    $region103: #{block_forward.1} parent=1 // pred_check_branch
      %2211 = sbr.rel (0) target = $region105
    $region104: #{block_forward.1} parent=1 // pred_region
      %s2213 = ssub.s32 32, 32
      %2214 = vsyncadd [#allocation3], %s2213
      %s2216 = sshll.u32 [#allocation2], 4
      %s2217 = int_to_ptr.vmem [resolvable:$true] %s2216
      %2219 = dma.vmem_to_hbm [thread:$0]  %s2217, 32, %s25, [#allocation3]
    $region105: #{block_forward.1} parent=1 // pred_fallthru
      _
    // Predicated region
    $region106: #{block_forward.1} parent=1 // pred_check
      _
    $region107: #{block_forward.1} parent=1 // pred_check_branch
      %2221 = sbr.rel (0) target = $region109
    $region108: #{block_forward.1} parent=1 // pred_region
      _
    $region109: #{block_forward.1} parent=1 // pred_fallthru
      _
    // Predicated region
    $region110: #{block_forward.1} parent=1 // pred_check
      _
    $region111: #{block_forward.1} parent=1 // pred_check_branch
      %2223 = sbr.rel (0) target = $region113
    $region112: #{block_forward.1} parent=1 // pred_region
      %2224 = dma.done [#allocation3], 32
    $region113: #{block_forward.1} parent=1 // pred_fallthru
      _
    // Predicated region
    $region114: #{block_forward.1} parent=1 // pred_check
      _
    $region115: #{block_forward.1} parent=1 // pred_check_branch
      %2226 = sbr.rel (0) target = $region117
    $region116: #{block_forward.1} parent=1 // pred_region
      _
    $region117: #{block_forward.1} parent=1 // pred_fallthru
      _
    %2227 = vsyncpa [#allocation3], 1

</llo_original>
